<compile_context>
chip_gen: v5e
topology: v5e:2x2
jax: 0.10.0
libtpu: 0.0.40
codegen_flags: <defaults>
</compile_context>

<pallas_src>
import functools

import jax
import jax.numpy as jnp
from jax.experimental import pallas as pl
from jax.experimental.pallas import tpu as pltpu

EPS_BN = 1e-5
EPS_NORM = 1e-12


# ----------------------------------------------------------------------------
# Kernel 1: fused conv3x3 + bias + ReLU + masked global-average-pool
# ----------------------------------------------------------------------------
def _conv_gap_kernel(x_ref, w_ref, b_ref, mask_ref, pooled_ref, *, H, W):
    """One image per grid step.

    x_ref    : (1, P_pad, C) bf16  -- zero-padded image, spatial dims flattened
    w_ref    : (9, C, conv_ch) bf16 (resident)
    b_ref    : (1, conv_ch) f32     (resident)
    mask_ref : (H*(W+2), 1) f32     (resident; 1/(H*W) on valid cols, else 0)
    pooled_ref: (N, conv_ch) f32    (resident output block; row b written here)
    """
    b = pl.program_id(0)

    @pl.when(b == 0)
    def _init():
        pooled_ref[...] = jnp.zeros_like(pooled_ref)

    Wp = W + 2
    L = H * Wp
    conv_ch = w_ref.shape[-1]
    img = x_ref[0]                                   # (P_pad, C) bf16

    # In-kernel im2col: conv = sum over the 9 taps of a shifted 2-D matmul.
    acc = jnp.zeros((L, conv_ch), jnp.float32)
    for i in range(3):
        for j in range(3):
            d = i * Wp + j                           # static shift
            acc = acc + jnp.dot(img[d:d + L, :], w_ref[3 * i + j],
                                preferred_element_type=jnp.float32)

    acc = jnp.maximum(acc + b_ref[...], 0.0)          # bias + ReLU
    # Masked global average pool (mask zeros the 2 junk columns per row and
    # already carries the 1/(H*W) factor).
    pooled = jnp.sum(acc * mask_ref[...], axis=0, keepdims=True)  # (1, conv_ch)
    pooled_ref[pl.ds(b, 1), :] = pooled


def pallas_conv_relu_gap(x_flat, w9, bias, gap_mask, H, W):
    N, P_pad, C = x_flat.shape
    conv_ch = w9.shape[-1]
    return pl.pallas_call(
        functools.partial(_conv_gap_kernel, H=H, W=W),
        out_shape=jax.ShapeDtypeStruct((N, conv_ch), jnp.float32),
        grid=(N,),
        in_specs=[
            pl.BlockSpec((1, P_pad, C), lambda b: (b, 0, 0)),
            pl.BlockSpec(w9.shape, lambda b: (0, 0, 0)),
            pl.BlockSpec(bias.shape, lambda b: (0, 0)),
            pl.BlockSpec(gap_mask.shape, lambda b: (0, 0)),
        ],
        out_specs=pl.BlockSpec((N, conv_ch), lambda b: (0, 0)),
        compiler_params=pltpu.CompilerParams(
            # Output block is resident across the grid -> reduction-style axis.
            dimension_semantics=("arbitrary",),
            # Explicit scoped-VMEM limit: > v5e's 16 MiB default, and within
            # v7x's 64 MiB physical budget with double-buffering headroom.
            vmem_limit_bytes=32 * 1024 * 1024,
        ),
    )(x_flat, w9, bias, gap_mask)
    # TODO(synk): for very large H the (H*(W+2), conv_ch) in-kernel intermediate
    # should be processed in row chunks; unnecessary at these shapes.


# ----------------------------------------------------------------------------
# Kernel 2: fused backbone-fc(+ReLU) + projector Linear -> BN -> ReLU -> Linear
# ----------------------------------------------------------------------------
def _fc_projector_kernel(pooled_ref, fcw_ref, fcb_ref, w1_ref, g_ref, be_ref,
                         w2_ref, z_ref, lat_ref, *, n_views, batch):
    x = pooled_ref[...].astype(jnp.bfloat16)                          # (N, conv_ch)
    lat = jnp.dot(x, fcw_ref[...], preferred_element_type=jnp.float32)
    lat = jnp.maximum(lat + fcb_ref[...], 0.0)                        # (N, embed)
    lat_ref[...] = lat

    h = jnp.dot(lat.astype(jnp.bfloat16), w1_ref[...],
                preferred_element_type=jnp.float32)                   # (N, mlp)

    # BatchNorm1d (training-mode batch stats), computed PER VIEW so batching
    # the views through one kernel keeps the original per-call BN semantics.
    parts = []
    for v in range(n_views):
        hv = h[v * batch:(v + 1) * batch, :]
        mu = jnp.mean(hv, axis=0, keepdims=True)
        var = jnp.mean(jnp.square(hv - mu), axis=0, keepdims=True)
        parts.append((hv - mu) * jax.lax.rsqrt(var + EPS_BN))
    hn = parts[0] if n_views == 1 else jnp.concatenate(parts, axis=0)
    hn = jnp.maximum(hn * g_ref[...] + be_ref[...], 0.0)

    z_ref[...] = jnp.dot(hn.astype(jnp.bfloat16), w2_ref[...],
                         preferred_element_type=jnp.float32)          # (N, out)


def pallas_fc_projector(pooled, fc_w, fc_b, w1, gamma, beta, w2, n_views, batch):
    N = pooled.shape[0]
    embed_dim = fc_w.shape[1]
    out_dim = w2.shape[1]
    z, lat = pl.pallas_call(
        functools.partial(_fc_projector_kernel, n_views=n_views, batch=batch),
        out_shape=(jax.ShapeDtypeStruct((N, out_dim), jnp.float32),
                   jax.ShapeDtypeStruct((N, embed_dim), jnp.float32)),
    )(pooled, fc_w, fc_b, w1, gamma, beta, w2)
    return z, lat


# ----------------------------------------------------------------------------
# Kernel 3: symmetric InfoNCE pair loss + mean cosine similarity
# ----------------------------------------------------------------------------
def _contrastive_pair_kernel(z1_ref, z2_ref, loss_ref, sim_ref, *, inv_temp):
    z1 = z1_ref[...]
    z2 = z2_ref[...]
    inv_n1 = jax.lax.rsqrt(jnp.maximum(jnp.sum(z1 * z1, -1, keepdims=True), EPS_NORM))
    inv_n2 = jax.lax.rsqrt(jnp.maximum(jnp.sum(z2 * z2, -1, keepdims=True), EPS_NORM))
    z1n = z1 * inv_n1
    z2n = z2 * inv_n2

    # logits[i, j] = <z1n_i, z2n_j> / T  (contract feature axes; no transpose op)
    logits = jax.lax.dot_general(
        z1n, z2n, (((1,), (1,)), ((), ())),
        preferred_element_type=jnp.float32) * inv_temp

    diag = jnp.sum(z1n * z2n, axis=-1, keepdims=True)   # cosine sim, reused
    mean_pos = jnp.mean(diag) * inv_temp

    # Single exp pass shared between row- and column-logsumexp (global max).
    m_g = jnp.max(logits)
    e = jnp.exp(logits - m_g)
    lse_r = m_g + jnp.log(jnp.sum(e, axis=1, keepdims=True))   # CE(z1 -> z2)
    lse_c = m_g + jnp.log(jnp.sum(e, axis=0, keepdims=True))   # CE(z2 -> z1)

    loss12 = jnp.mean(lse_r) - mean_pos
    loss21 = jnp.mean(lse_c) - mean_pos
    loss_ref[0, 0] = 0.5 * (loss12 + loss21)
    sim_ref[0, 0] = jnp.mean(diag)


def pallas_contrastive_pair(z1, z2, temperature):
    loss, sim = pl.pallas_call(
        functools.partial(_contrastive_pair_kernel,
                          inv_temp=1.0 / float(temperature)),
        out_shape=(jax.ShapeDtypeStruct((1, 1), jnp.float32),
                   jax.ShapeDtypeStruct((1, 1), jnp.float32)),
    )(z1, z2)
    return loss[0, 0], sim[0, 0]


# ----------------------------------------------------------------------------
# SimCLR model (JAX glue around the Pallas kernels)
# ----------------------------------------------------------------------------
class SimCLRPallas:
    def __init__(self, key, in_ch=3, conv_ch=32, embed_dim=128, mlp_dim=128,
                 out_dim=64, temperature=0.5):
        self.temperature = float(temperature)
        self.in_ch = in_ch
        self.conv_ch = conv_ch
        self.embed_dim = embed_dim
        self.out_dim = out_dim
        k = jax.random.split(key, 6)
        s = 0.05
        # Backbone stand-in (conv3x3 + ReLU + GAP + Linear + ReLU).  Weights
        # used on the MXU are stored in bf16; biases/affine params in f32.
        self.conv_w = (s * jax.random.normal(k[0], (9, in_ch, conv_ch))).astype(jnp.bfloat16)
        self.conv_b = (s * jax.random.normal(k[1], (1, conv_ch))).astype(jnp.float32)
        self.fc_w = (s * jax.random.normal(k[2], (conv_ch, embed_dim))).astype(jnp.bfloat16)
        self.fc_b = (s * jax.random.normal(k[3], (1, embed_dim))).astype(jnp.float32)
        # Projector: Linear(no bias) -> BN -> ReLU -> Linear(no bias)
        self.p_w1 = (s * jax.random.normal(k[4], (embed_dim, mlp_dim))).astype(jnp.bfloat16)
        self.p_gamma = jnp.ones((1, mlp_dim), jnp.float32)
        self.p_beta = jnp.zeros((1, mlp_dim), jnp.float32)
        self.p_w2 = (s * jax.random.normal(k[5], (mlp_dim, out_dim))).astype(jnp.bfloat16)

    # ---- fused backbone + projector for a stack of same-shaped views -------
    def _encode_group(self, x_nchw, n_views):
        Nimg, C, H, W = x_nchw.shape
        B = Nimg // n_views
        # NCHW (PyTorch) -> NHWC, zero-pad spatially, flatten spatial dims so
        # the kernel can form the 9 conv taps as shifted 2-D slices.
        x = jnp.transpose(x_nchw, (0, 2, 3, 1)).astype(jnp.float32)
        xp = jnp.pad(x, ((0, 0), (1, 1), (1, 1), (0, 0)))
        P = (H + 2) * (W + 2)
        L = H * (W + 2)
        P_pad = ((P + 2 + 7) // 8) * 8   # room for the (i,j)=(2,2) shifted view
        flat = xp.reshape(Nimg, P, C)
        flat = jnp.pad(flat, ((0, 0), (0, P_pad - P), (0, 0))).astype(jnp.bfloat16)
        # GAP mask: 1/(H*W) on the W valid columns of each row, 0 on padding.
        col = jnp.arange(L) % (W + 2)
        gap_mask = jnp.where(col < W, 1.0 / (H * W), 0.0).astype(jnp.float32)
        gap_mask = gap_mask.reshape(L, 1)

        pooled = pallas_conv_relu_gap(flat, self.conv_w, self.conv_b,
                                      gap_mask, H, W)            # (Nimg, conv_ch)
        z, lat = pallas_fc_projector(pooled, self.fc_w, self.fc_b, self.p_w1,
                                     self.p_gamma, self.p_beta, self.p_w2,
                                     n_views, B)
        return z, lat

    def representation(self, x):
        if isinstance(x, (list, tuple)):
            x = x[0]
        z, lat = self._encode_group(x, n_views=1)
        return dict(latent=lat, proj=z)

    def forward(self, samples):
        log = {}
        views = list(samples)
        assert len(views) >= 2
        # Group same-shaped views so they share one fused backbone+projector
        # pass (BN statistics stay per-view inside the kernel).
        groups = {}
        for idx, v in enumerate(views):
            groups.setdefault(tuple(v.shape), []).append(idx)
        z = [None] * len(views)
        for shape, idxs in groups.items():
            x = jnp.concatenate([views[i] for i in idxs], axis=0)
            zz, _ = self._encode_group(x, n_views=len(idxs))
            B = shape[0]
            for slot, i in enumerate(idxs):
                z[i] = zz[slot * B:(slot + 1) * B]

        z1, z2 = z[0], z[1]
        # (contrastive_loss(z1,z2) + contrastive_loss(z2,z1)) / 2, plus cos-sim
        loss, sim = pallas_contrastive_pair(z1, z2, self.temperature)

        loss_local = jnp.float32(0.0)
        for lp in z[2:]:
            l1, _ = pallas_contrastive_pair(z1, lp, self.temperature)
            l2, _ = pallas_contrastive_pair(z2, lp, self.temperature)
            # == (CL(z1,lp)+CL(lp,z1)+CL(z2,lp)+CL(lp,z2)) / 4
            loss_local = loss_local + 0.5 * (l1 + l2)
        if len(views) > 2:
            loss = loss + loss_local
            log['loss_local'] = loss_local
        log['z@sim'] = sim
        return loss, log


if __name__ == "__main__":
    key = jax.random.PRNGKey(0)
    k_param, k_x1, k_x2, k_xl = jax.random.split(key, 4)

    model = SimCLRPallas(k_param, in_ch=3, conv_ch=32, embed_dim=128,
                         mlp_dim=128, out_dim=64, temperature=0.5)

    # Small shapes, NCHW like the PyTorch module: two global views + one local.
    B = 8
    x1 = jax.random.normal(k_x1, (B, 3, 16, 16), jnp.float32)
    x2 = jax.random.normal(k_x2, (B, 3, 16, 16), jnp.float32)
    xl = jax.random.normal(k_xl, (B, 3, 8, 8), jnp.float32)

    loss, log = model.forward([x1, x2, xl])
    loss = jax.block_until_ready(loss)
    sim = jax.block_until_ready(log['z@sim'])
    loss_local = jax.block_until_ready(log['loss_local'])
    assert jnp.isfinite(loss) and jnp.isfinite(sim) and jnp.isfinite(loss_local)
    print("KERNEL_OK")
</pallas_src>

<mosaic_0001>
module attributes {stable_mosaic.version = 11 : i64} {
  func.func @_conv_gap_kernel(%arg0: i32, %arg1: memref<1x328x3xbf16, #tpu.memory_space<vmem>>, %arg2: memref<9x3x32xbf16, #tpu.memory_space<vmem>>, %arg3: memref<1x32xf32, #tpu.memory_space<vmem>>, %arg4: memref<288x1xf32, #tpu.memory_space<vmem>>, %arg5: memref<16x32xf32, #tpu.memory_space<vmem>>) attributes {dimension_semantics = [#tpu.dimension_semantics<arbitrary>], iteration_bounds = array<i64: 16>, scalar_prefetch = 0 : i64, scratch_operands = 0 : i64, tpu.core_type = #tpu.core_type<tc>, window_params = [{transform_indices = @transform_0, window_bounds = array<i64: 1, 328, 3>}, {pipeline_mode = #tpu.pipeline_mode<synchronous>, transform_indices = @transform_1, window_bounds = array<i64: 9, 3, 32>}, {pipeline_mode = #tpu.pipeline_mode<synchronous>, transform_indices = @transform_2, window_bounds = array<i64: 1, 32>}, {pipeline_mode = #tpu.pipeline_mode<synchronous>, transform_indices = @transform_3, window_bounds = array<i64: 288, 1>}, {pipeline_mode = #tpu.pipeline_mode<synchronous>, transform_indices = @transform_4, window_bounds = array<i64: 16, 32>}]} {
    %c0_i32 = arith.constant 0 : i32
    %0 = arith.cmpi eq, %arg0, %c0_i32 : i32
    %1 = arith.extui %0 : i1 to i32
    %c0_i32_0 = arith.constant 0 : i32
    %2 = arith.cmpi ne, %1, %c0_i32_0 : i32
    scf.if %2 {
      %cst_38 = arith.constant 0.000000e+00 : f32
      %63 = vector.broadcast %cst_38 : f32 to vector<16x32xf32>
      %c0_39 = arith.constant 0 : index
      %c0_40 = arith.constant 0 : index
      %64 = vector.load %arg5[%c0_39, %c0_40] : memref<16x32xf32, #tpu.memory_space<vmem>>, vector<16x32xf32>
      tpu.vector_store %arg5[%c0_39, %c0_40], %63 {strides = array<i32>} : memref<16x32xf32, #tpu.memory_space<vmem>>, vector<16x32xf32>,
    } else {
    }
    %c0 = arith.constant 0 : index
    %c0_1 = arith.constant 0 : index
    %c0_2 = arith.constant 0 : index
    %3 = vector.load %arg1[%c0, %c0_1, %c0_2] : memref<1x328x3xbf16, #tpu.memory_space<vmem>>, vector<1x328x3xbf16>
    %4 = vector.shape_cast %3 : vector<1x328x3xbf16> to vector<328x3xbf16>
    %cst = arith.constant 0.000000e+00 : f32
    %5 = vector.broadcast %cst : f32 to vector<288x32xf32>
    %6 = vector.extract_strided_slice %4 {offsets = [0, 0], sizes = [288, 3], strides = [1, 1]} : vector<328x3xbf16> to vector<288x3xbf16>
    %c0_3 = arith.constant 0 : index
    %c0_4 = arith.constant 0 : index
    %c0_5 = arith.constant 0 : index
    %7 = vector.load %arg2[%c0_3, %c0_4, %c0_5] : memref<9x3x32xbf16, #tpu.memory_space<vmem>>, vector<1x3x32xbf16>
    %8 = vector.shape_cast %7 : vector<1x3x32xbf16> to vector<3x32xbf16>
    %cst_6 = arith.constant dense<0.000000e+00> : vector<288x32xf32>
    %9 = tpu.matmul %6, %8, %cst_6 {dimension_numbers = #tpu.dot_dimension_numbers<[1], [0], [0], [1], [0, 0, 1, 1], [], []>} : vector<288x3xbf16>, vector<3x32xbf16>, vector<288x32xf32> -> vector<288x32xf32>
    %10 = arith.addf %5, %9 : vector<288x32xf32>
    %11 = vector.extract_strided_slice %4 {offsets = [1, 0], sizes = [288, 3], strides = [1, 1]} : vector<328x3xbf16> to vector<288x3xbf16>
    %c1 = arith.constant 1 : index
    %c0_7 = arith.constant 0 : index
    %c0_8 = arith.constant 0 : index
    %12 = vector.load %arg2[%c1, %c0_7, %c0_8] : memref<9x3x32xbf16, #tpu.memory_space<vmem>>, vector<1x3x32xbf16>
    %13 = vector.shape_cast %12 : vector<1x3x32xbf16> to vector<3x32xbf16>
    %cst_9 = arith.constant dense<0.000000e+00> : vector<288x32xf32>
    %14 = tpu.matmul %11, %13, %cst_9 {dimension_numbers = #tpu.dot_dimension_numbers<[1], [0], [0], [1], [0, 0, 1, 1], [], []>} : vector<288x3xbf16>, vector<3x32xbf16>, vector<288x32xf32> -> vector<288x32xf32>
    %15 = arith.addf %10, %14 : vector<288x32xf32>
    %16 = vector.extract_strided_slice %4 {offsets = [2, 0], sizes = [288, 3], strides = [1, 1]} : vector<328x3xbf16> to vector<288x3xbf16>
    %c2 = arith.constant 2 : index
    %c0_10 = arith.constant 0 : index
    %c0_11 = arith.constant 0 : index
    %17 = vector.load %arg2[%c2, %c0_10, %c0_11] : memref<9x3x32xbf16, #tpu.memory_space<vmem>>, vector<1x3x32xbf16>
    %18 = vector.shape_cast %17 : vector<1x3x32xbf16> to vector<3x32xbf16>
    %cst_12 = arith.constant dense<0.000000e+00> : vector<288x32xf32>
    %19 = tpu.matmul %16, %18, %cst_12 {dimension_numbers = #tpu.dot_dimension_numbers<[1], [0], [0], [1], [0, 0, 1, 1], [], []>} : vector<288x3xbf16>, vector<3x32xbf16>, vector<288x32xf32> -> vector<288x32xf32>
    %20 = arith.addf %15, %19 : vector<288x32xf32>
    %21 = vector.extract_strided_slice %4 {offsets = [18, 0], sizes = [288, 3], strides = [1, 1]} : vector<328x3xbf16> to vector<288x3xbf16>
    %c3 = arith.constant 3 : index
    %c0_13 = arith.constant 0 : index
    %c0_14 = arith.constant 0 : index
    %22 = vector.load %arg2[%c3, %c0_13, %c0_14] : memref<9x3x32xbf16, #tpu.memory_space<vmem>>, vector<1x3x32xbf16>
    %23 = vector.shape_cast %22 : vector<1x3x32xbf16> to vector<3x32xbf16>
    %cst_15 = arith.constant dense<0.000000e+00> : vector<288x32xf32>
    %24 = tpu.matmul %21, %23, %cst_15 {dimension_numbers = #tpu.dot_dimension_numbers<[1], [0], [0], [1], [0, 0, 1, 1], [], []>} : vector<288x3xbf16>, vector<3x32xbf16>, vector<288x32xf32> -> vector<288x32xf32>
    %25 = arith.addf %20, %24 : vector<288x32xf32>
    %26 = vector.extract_strided_slice %4 {offsets = [19, 0], sizes = [288, 3], strides = [1, 1]} : vector<328x3xbf16> to vector<288x3xbf16>
    %c4 = arith.constant 4 : index
    %c0_16 = arith.constant 0 : index
    %c0_17 = arith.constant 0 : index
    %27 = vector.load %arg2[%c4, %c0_16, %c0_17] : memref<9x3x32xbf16, #tpu.memory_space<vmem>>, vector<1x3x32xbf16>
    %28 = vector.shape_cast %27 : vector<1x3x32xbf16> to vector<3x32xbf16>
    %cst_18 = arith.constant dense<0.000000e+00> : vector<288x32xf32>
    %29 = tpu.matmul %26, %28, %cst_18 {dimension_numbers = #tpu.dot_dimension_numbers<[1], [0], [0], [1], [0, 0, 1, 1], [], []>} : vector<288x3xbf16>, vector<3x32xbf16>, vector<288x32xf32> -> vector<288x32xf32>
    %30 = arith.addf %25, %29 : vector<288x32xf32>
    %31 = vector.extract_strided_slice %4 {offsets = [20, 0], sizes = [288, 3], strides = [1, 1]} : vector<328x3xbf16> to vector<288x3xbf16>
    %c5 = arith.constant 5 : index
    %c0_19 = arith.constant 0 : index
    %c0_20 = arith.constant 0 : index
    %32 = vector.load %arg2[%c5, %c0_19, %c0_20] : memref<9x3x32xbf16, #tpu.memory_space<vmem>>, vector<1x3x32xbf16>
    %33 = vector.shape_cast %32 : vector<1x3x32xbf16> to vector<3x32xbf16>
    %cst_21 = arith.constant dense<0.000000e+00> : vector<288x32xf32>
    %34 = tpu.matmul %31, %33, %cst_21 {dimension_numbers = #tpu.dot_dimension_numbers<[1], [0], [0], [1], [0, 0, 1, 1], [], []>} : vector<288x3xbf16>, vector<3x32xbf16>, vector<288x32xf32> -> vector<288x32xf32>
    %35 = arith.addf %30, %34 : vector<288x32xf32>
    %36 = vector.extract_strided_slice %4 {offsets = [36, 0], sizes = [288, 3], strides = [1, 1]} : vector<328x3xbf16> to vector<288x3xbf16>
    %c6 = arith.constant 6 : index
    %c0_22 = arith.constant 0 : index
    %c0_23 = arith.constant 0 : index
    %37 = vector.load %arg2[%c6, %c0_22, %c0_23] : memref<9x3x32xbf16, #tpu.memory_space<vmem>>, vector<1x3x32xbf16>
    %38 = vector.shape_cast %37 : vector<1x3x32xbf16> to vector<3x32xbf16>
    %cst_24 = arith.constant dense<0.000000e+00> : vector<288x32xf32>
    %39 = tpu.matmul %36, %38, %cst_24 {dimension_numbers = #tpu.dot_dimension_numbers<[1], [0], [0], [1], [0, 0, 1, 1], [], []>} : vector<288x3xbf16>, vector<3x32xbf16>, vector<288x32xf32> -> vector<288x32xf32>
    %40 = arith.addf %35, %39 : vector<288x32xf32>
    %41 = vector.extract_strided_slice %4 {offsets = [37, 0], sizes = [288, 3], strides = [1, 1]} : vector<328x3xbf16> to vector<288x3xbf16>
    %c7 = arith.constant 7 : index
    %c0_25 = arith.constant 0 : index
    %c0_26 = arith.constant 0 : index
    %42 = vector.load %arg2[%c7, %c0_25, %c0_26] : memref<9x3x32xbf16, #tpu.memory_space<vmem>>, vector<1x3x32xbf16>
    %43 = vector.shape_cast %42 : vector<1x3x32xbf16> to vector<3x32xbf16>
    %cst_27 = arith.constant dense<0.000000e+00> : vector<288x32xf32>
    %44 = tpu.matmul %41, %43, %cst_27 {dimension_numbers = #tpu.dot_dimension_numbers<[1], [0], [0], [1], [0, 0, 1, 1], [], []>} : vector<288x3xbf16>, vector<3x32xbf16>, vector<288x32xf32> -> vector<288x32xf32>
    %45 = arith.addf %40, %44 : vector<288x32xf32>
    %46 = vector.extract_strided_slice %4 {offsets = [38, 0], sizes = [288, 3], strides = [1, 1]} : vector<328x3xbf16> to vector<288x3xbf16>
    %c8 = arith.constant 8 : index
    %c0_28 = arith.constant 0 : index
    %c0_29 = arith.constant 0 : index
    %47 = vector.load %arg2[%c8, %c0_28, %c0_29] : memref<9x3x32xbf16, #tpu.memory_space<vmem>>, vector<1x3x32xbf16>
    %48 = vector.shape_cast %47 : vector<1x3x32xbf16> to vector<3x32xbf16>
    %cst_30 = arith.constant dense<0.000000e+00> : vector<288x32xf32>
    %49 = tpu.matmul %46, %48, %cst_30 {dimension_numbers = #tpu.dot_dimension_numbers<[1], [0], [0], [1], [0, 0, 1, 1], [], []>} : vector<288x3xbf16>, vector<3x32xbf16>, vector<288x32xf32> -> vector<288x32xf32>
    %50 = arith.addf %45, %49 : vector<288x32xf32>
    %c0_31 = arith.constant 0 : index
    %c0_32 = arith.constant 0 : index
    %51 = vector.load %arg3[%c0_31, %c0_32] : memref<1x32xf32, #tpu.memory_space<vmem>>, vector<1x32xf32>
    %52 = vector.broadcast %51 : vector<1x32xf32> to vector<288x32xf32>
    %53 = arith.addf %50, %52 : vector<288x32xf32>
    %cst_33 = arith.constant 0.000000e+00 : f32
    %54 = vector.broadcast %cst_33 : f32 to vector<288x32xf32>
    %55 = arith.maximumf %53, %54 : vector<288x32xf32>
    %c0_34 = arith.constant 0 : index
    %c0_35 = arith.constant 0 : index
    %56 = vector.load %arg4[%c0_34, %c0_35] : memref<288x1xf32, #tpu.memory_space<vmem>>, vector<288x1xf32>
    %57 = vector.broadcast %56 : vector<288x1xf32> to vector<288x32xf32>
    %58 = arith.mulf %55, %57 : vector<288x32xf32>
    %cst_36 = arith.constant dense<0.000000e+00> : vector<32xf32>
    %59 = vector.multi_reduction <add>, %58, %cst_36 [0] : vector<288x32xf32> to vector<32xf32>
    %60 = vector.shape_cast %59 : vector<32xf32> to vector<1x32xf32>
    %61 = arith.index_cast %arg0 : i32 to index
    %c0_37 = arith.constant 0 : index
    %62 = vector.load %arg5[%61, %c0_37] : memref<16x32xf32, #tpu.memory_space<vmem>>, vector<1x32xf32>
    tpu.vector_store %arg5[%61, %c0_37], %60 {strides = array<i32>} : memref<16x32xf32, #tpu.memory_space<vmem>>, vector<1x32xf32>,
    return
  }
  func.func @transform_0(%arg0: i32) -> (i32, i32, i32) {
    %c0_i32 = arith.constant 0 : i32
    %c0_i32_0 = arith.constant 0 : i32
    %c0_i32_1 = arith.constant 0 : i32
    return %arg0, %c0_i32, %c0_i32_0 : i32, i32, i32
  }
  func.func @transform_1(%arg0: i32) -> (i32, i32, i32) {
    %c0_i32 = arith.constant 0 : i32
    %c0_i32_0 = arith.constant 0 : i32
    %c0_i32_1 = arith.constant 0 : i32
    %c0_i32_2 = arith.constant 0 : i32
    return %c0_i32, %c0_i32_0, %c0_i32_1 : i32, i32, i32
  }
  func.func @transform_2(%arg0: i32) -> (i32, i32) {
    %c0_i32 = arith.constant 0 : i32
    %c0_i32_0 = arith.constant 0 : i32
    %c0_i32_1 = arith.constant 0 : i32
    return %c0_i32, %c0_i32_0 : i32, i32
  }
  func.func @transform_3(%arg0: i32) -> (i32, i32) {
    %c0_i32 = arith.constant 0 : i32
    %c0_i32_0 = arith.constant 0 : i32
    %c0_i32_1 = arith.constant 0 : i32
    return %c0_i32, %c0_i32_0 : i32, i32
  }
  func.func @transform_4(%arg0: i32) -> (i32, i32) {
    %c0_i32 = arith.constant 0 : i32
    %c0_i32_0 = arith.constant 0 : i32
    %c0_i32_1 = arith.constant 0 : i32
    return %c0_i32, %c0_i32_0 : i32, i32
  }
}

</mosaic_0001>

<llo_original>
// kernel: tpu_custom_call.1
$region0: #{tpu_custom_call.1}
  #allocation0 [shape = 'u32[]', space=smem, size = 0x4, offset = 0x4, fixed_abs, tag = 'smem constant byte address 0x4 - core index']
  #allocation1 [shape = 'u32[72,128]{1,0:T(1,128)}', space=vmem, size = 0x9000, scoped, tag = 'internal scratch']
  %s0 = inlined_call_operand.vmem [shape: bf16[16,328,3], index: 0, kind: input, shape index: {}]
  %s1 = inlined_call_operand.vmem [shape: bf16[9,3,32], index: 1, kind: input, shape index: {}]
  %s2 = inlined_call_operand.vmem [shape: f32[1,32], index: 2, kind: input, shape index: {}]
  %s3 = inlined_call_operand.vmem [shape: f32[288,1], index: 3, kind: input, shape index: {}]
  %s4 = inlined_call_operand.hbm [shape: f32[16,32], index: 4, kind: output, shape index: {}]
  %s5 = sld [smem:[#allocation0]]
  $region53: #{tpu_custom_call.1} parent=0
    _
  %s7 = ssub.s32 1, %s5
  %s8 = scalar_select 0, %s7, %s5
  $region1: #{tpu_custom_call.1} parent=0
    #allocation2 [shape = 'u8[8192]{0}', space=vmem, size = 0x2000, scoped, tag = 'output window, operand 0, single buffered']
    #allocation3 [shape = 's32[2]{0}', space=sflag, size = 0x8, scoped, tag = 'scoped memory for tpu_custom_call.1']
    %9 = vsyncpa [#allocation3], 0
    loop: start=0, step=1, limit=18
    $region2: #{tpu_custom_call.1} parent=1 // loop_pre_header
      _
    $region3: #{tpu_custom_call.1} parent=1 // loop_header
      %s11 = sphi 0, %s15
      %p12 = scmp.ge.s32.totalorder %s11, 18
      %s21 = sphi 0, %s23
      %s24 = sphi 0, %s21
      %s25 = sphi 0, %s24
      %s41 = sphi 0, %s25
      %s45 = sphi 0, %s45
      %s47 = sphi 0, %s45
      %s48 = sphi 0, %s47
      %s62 = sphi 0, %s48
      %s66 = sphi 0, %s66
      %s68 = sphi 0, %s66
      %s69 = sphi 0, %s68
      %s83 = sphi 0, %s69
      %s87 = sphi 0, %s87
      %s89 = sphi 0, %s87
      %s90 = sphi 0, %s89
      %s104 = sphi 0, %s90
      %s108 = sphi 0, %s108
      %s110 = sphi 0, %s108
      %s111 = sphi 0, %s110
      %s125 = sphi 0, %s111
    $region4: #{tpu_custom_call.1} parent=1 // loop_header_branch
      %14 = sbr.rel (%p12) target = $region8
    $region5: #{tpu_custom_call.1} parent=1 // loop_body
      %s16 = ssub.s32 %s11, 1
      %s17 = ssub.s32 %s11, 2
      %s18 = sadd.s32 %s11, 1
      %s19 = ssub.s32 %s11, %s18
      %p20 = scmp.eq.s32.totalorder %s19, 0
      %s22 = sadd.s32 %s21, 1
      %s23 = scalar_select %p20, %s21, %s22
      %p26 = pneg %p20
      %p27 = scmp.eq.s32.totalorder %s11, 15
      %p28 = por %p26, %p27
      %p29 = scmp.ne.s32.totalorder %s21, %s24
      %p30 = scmp.eq.s32.totalorder %s11, 0
      %p31 = por %p29, %p30
      %p32 = scmp.ne.s32.totalorder %s21, %s24
      %p33 = scmp.eq.s32.totalorder %s16, 15
      %p34 = por %p32, %p33
      %p35 = scmp.ne.s32.totalorder %s24, %s25
      %p36 = scmp.eq.s32.totalorder %s16, 0
      %p37 = por %p35, %p36
      %p38 = scmp.ne.s32.totalorder %s24, %s25
      %p39 = scmp.eq.s32.totalorder %s17, 15
      %p40 = por %p38, %p39
      %p42 = scmp.ne.s32.totalorder %s25, %s41
      %p43 = scmp.eq.s32.totalorder %s17, 0
      %p44 = por %p42, %p43
      %s46 = sadd.s32 %s45, 1
      %p49 = scmp.eq.s32.totalorder %s11, 15
      %p50 = scmp.ne.s32.totalorder %s45, %s47
      %p51 = scmp.eq.s32.totalorder %s11, 0
      %p52 = por %p50, %p51
      %p53 = scmp.ne.s32.totalorder %s45, %s47
      %p54 = scmp.eq.s32.totalorder %s16, 15
      %p55 = por %p53, %p54
      %p56 = scmp.ne.s32.totalorder %s47, %s48
      %p57 = scmp.eq.s32.totalorder %s16, 0
      %p58 = por %p56, %p57
      %p59 = scmp.ne.s32.totalorder %s47, %s48
      %p60 = scmp.eq.s32.totalorder %s17, 15
      %p61 = por %p59, %p60
      %p63 = scmp.ne.s32.totalorder %s48, %s62
      %p64 = scmp.eq.s32.totalorder %s17, 0
      %p65 = por %p63, %p64
      %s67 = sadd.s32 %s66, 1
      %p70 = scmp.eq.s32.totalorder %s11, 15
      %p71 = scmp.ne.s32.totalorder %s66, %s68
      %p72 = scmp.eq.s32.totalorder %s11, 0
      %p73 = por %p71, %p72
      %p74 = scmp.ne.s32.totalorder %s66, %s68
      %p75 = scmp.eq.s32.totalorder %s16, 15
      %p76 = por %p74, %p75
      %p77 = scmp.ne.s32.totalorder %s68, %s69
      %p78 = scmp.eq.s32.totalorder %s16, 0
      %p79 = por %p77, %p78
      %p80 = scmp.ne.s32.totalorder %s68, %s69
      %p81 = scmp.eq.s32.totalorder %s17, 15
      %p82 = por %p80, %p81
      %p84 = scmp.ne.s32.totalorder %s69, %s83
      %p85 = scmp.eq.s32.totalorder %s17, 0
      %p86 = por %p84, %p85
      %s88 = sadd.s32 %s87, 1
      %p91 = scmp.eq.s32.totalorder %s11, 15
      %p92 = scmp.ne.s32.totalorder %s87, %s89
      %p93 = scmp.eq.s32.totalorder %s11, 0
      %p94 = por %p92, %p93
      %p95 = scmp.ne.s32.totalorder %s87, %s89
      %p96 = scmp.eq.s32.totalorder %s16, 15
      %p97 = por %p95, %p96
      %p98 = scmp.ne.s32.totalorder %s89, %s90
      %p99 = scmp.eq.s32.totalorder %s16, 0
      %p100 = por %p98, %p99
      %p101 = scmp.ne.s32.totalorder %s89, %s90
      %p102 = scmp.eq.s32.totalorder %s17, 15
      %p103 = por %p101, %p102
      %p105 = scmp.ne.s32.totalorder %s90, %s104
      %p106 = scmp.eq.s32.totalorder %s17, 0
      %p107 = por %p105, %p106
      %s109 = sadd.s32 %s108, 1
      %p112 = scmp.eq.s32.totalorder %s11, 15
      %p113 = scmp.ne.s32.totalorder %s108, %s110
      %p114 = scmp.eq.s32.totalorder %s11, 0
      %p115 = por %p113, %p114
      %p116 = scmp.ne.s32.totalorder %s108, %s110
      %p117 = scmp.eq.s32.totalorder %s16, 15
      %p118 = por %p116, %p117
      %p119 = scmp.ne.s32.totalorder %s110, %s111
      %p120 = scmp.eq.s32.totalorder %s16, 0
      %p121 = por %p119, %p120
      %p122 = scmp.ne.s32.totalorder %s110, %s111
      %p123 = scmp.eq.s32.totalorder %s17, 15
      %p124 = por %p122, %p123
      %p126 = scmp.ne.s32.totalorder %s111, %s125
      %p127 = scmp.eq.s32.totalorder %s17, 0
      %p128 = por %p126, %p127
      %p129 = scmp.le.s32.totalorder 1, %s11
      %p130 = scmp.lt.s32.totalorder %s11, 17
      %p131 = pnand %p129, %p130
      %p132 = pneg %p131
      // Predicated region
      $region9: #{tpu_custom_call.1} parent=5 // pred_check
        _
      $region10: #{tpu_custom_call.1} parent=5 // pred_check_branch
        %134 = sbr.rel (%p131) target = $region12
      $region11: #{tpu_custom_call.1} parent=5 // pred_region
        %s135 = ssub.s32 %s11, 1
        // Predicated region
        $region13: #{tpu_custom_call.1} parent=11 // pred_check
          %p136 = pneg %p58
        $region14: #{tpu_custom_call.1} parent=11 // pred_check_branch
          %138 = sbr.rel (%p136) target = $region16
        $region15: #{tpu_custom_call.1} parent=11 // pred_region
          _
        $region16: #{tpu_custom_call.1} parent=11 // pred_fallthru
          _
        // Predicated region
        $region17: #{tpu_custom_call.1} parent=11 // pred_check
          %p139 = pneg %p79
        $region18: #{tpu_custom_call.1} parent=11 // pred_check_branch
          %141 = sbr.rel (%p139) target = $region20
        $region19: #{tpu_custom_call.1} parent=11 // pred_region
          _
        $region20: #{tpu_custom_call.1} parent=11 // pred_fallthru
          _
        // Predicated region
        $region21: #{tpu_custom_call.1} parent=11 // pred_check
          %p142 = pneg %p100
        $region22: #{tpu_custom_call.1} parent=11 // pred_check_branch
          %144 = sbr.rel (%p142) target = $region24
        $region23: #{tpu_custom_call.1} parent=11 // pred_region
          _
        $region24: #{tpu_custom_call.1} parent=11 // pred_fallthru
          _
      $region12: #{tpu_custom_call.1} parent=5 // pred_fallthru
        _
      %p145 = scmp.lt.s32.totalorder %s11, 16
      // Predicated region
      $region25: #{tpu_custom_call.1} parent=5 // pred_check
        %p146 = pneg %p145
      $region26: #{tpu_custom_call.1} parent=5 // pred_check_branch
        %148 = sbr.rel (%p146) target = $region28
      $region27: #{tpu_custom_call.1} parent=5 // pred_region
        // Predicated region
        $region29: #{tpu_custom_call.1} parent=27 // pred_check
          %p149 = pneg %p31
        $region30: #{tpu_custom_call.1} parent=27 // pred_check_branch
          %151 = sbr.rel (%p149) target = $region32
        $region31: #{tpu_custom_call.1} parent=27 // pred_region
          %p152 = scmp.lt.s32.totalorder %s11, 15
          %s153 = scalar_select %p152, %s11, 15
          %s154 = smul.addr %s153, 41
          %s155 = smul.addr %s154, 4
          %s156 = scalar_lea.vmem %s0, %s155
        $region32: #{tpu_custom_call.1} parent=27 // pred_fallthru
          _
      $region28: #{tpu_custom_call.1} parent=5 // pred_fallthru
        _
      %p157 = scmp.le.s32.totalorder 1, %s11
      %p158 = scmp.lt.s32.totalorder %s11, 17
      %p159 = pnand %p157, %p158
      %p160 = pneg %p159
      // Predicated region
      $region33: #{tpu_custom_call.1} parent=5 // pred_check
        _
      $region34: #{tpu_custom_call.1} parent=5 // pred_check_branch
        %162 = sbr.rel (%p159) target = $region36
      $region35: #{tpu_custom_call.1} parent=5 // pred_region
        %s163 = ssub.s32 %s11, 1
        %p164 = scmp.lt.s32.totalorder %s16, 15
        %s165 = scalar_select %p164, %s16, 15
        %s166 = smul.addr %s165, 41
        %s167 = smul.addr %s166, 4
        %s168 = scalar_lea.vmem %s0, %s167
        %p169 = pneg %p37
        %p170 = pneg %p34
        %p171 = pneg %p58
        %p172 = pneg %p55
        %p173 = pneg %p79
        %p174 = pneg %p76
        %p175 = pneg %p100
        %p176 = pneg %p97
        %p177 = pneg %p121
        %p178 = pneg %p118
        %p179 = scmp.lt.s32.totalorder %s16, 15
        %s180 = scalar_select %p179, %s16, 15
        %s181 = smul.addr %s180, 41
        %s182 = smul.addr %s181, 4
        %s183 = scalar_lea.vmem %s0, %s182
        %p185 = scmp.eq.s32.totalorder %s16, 0
        // Predicated region
        $region37: #{tpu_custom_call.1} parent=35 // pred_check
          %p186 = pneg %p185
        $region38: #{tpu_custom_call.1} parent=35 // pred_check_branch
          %188 = sbr.rel (%p186) target = $region40
        $region39: #{tpu_custom_call.1} parent=35 // pred_region
          %vm189 = vcmask 261120
          %190 = vst.msk [vmem:[#allocation2] sm:$0xff] %vm189, 0.0
          %191 = vst.msk [vmem:[#allocation2 + $0x8] sm:$0xff] %vm189, 0.0
        $region40: #{tpu_custom_call.1} parent=35 // pred_fallthru
          _
        %v192 = vld [vmem:[%s183] sm:$0xf]
        %v193 = vld [vmem:[%s183 + $0x4] sm:$0xf]
        %v194 = vld [vmem:[%s183 + $0x8] sm:$0xf]
        %v195 = vld [vmem:[%s183 + $0xc] sm:$0xf]
        %v196 = vld [vmem:[%s183 + $0x10] sm:$0xf]
        %v197 = vld [vmem:[%s183 + $0x14] sm:$0xf]
        %v198 = vld [vmem:[%s183 + $0x18] sm:$0xf]
        %v199 = vld [vmem:[%s183 + $0x1c] sm:$0xf]
        %v200 = vld [vmem:[%s183 + $0x20] sm:$0xf]
        %v201 = vld [vmem:[%s183 + $0x24] sm:$0xf]
        %v202 = vld [vmem:[%s183 + $0x28] sm:$0xf]
        %v203 = vld [vmem:[%s183 + $0x2c] sm:$0xf]
        %v204 = vld [vmem:[%s183 + $0x30] sm:$0xf]
        %v205 = vld [vmem:[%s183 + $0x34] sm:$0xf]
        %v206 = vld [vmem:[%s183 + $0x38] sm:$0xf]
        %v207 = vld [vmem:[%s183 + $0x3c] sm:$0xf]
        %v208 = vld [vmem:[%s183 + $0x40] sm:$0xf]
        %v209 = vld [vmem:[%s183 + $0x44] sm:$0xf]
        %v210 = vld [vmem:[%s183 + $0x48] sm:$0xf]
        %v211 = vld [vmem:[%s183 + $0x4c] sm:$0xf]
        %v212 = vld [vmem:[%s183 + $0x50] sm:$0xf]
        %v213 = vld [vmem:[%s183 + $0x54] sm:$0xf]
        %v214 = vld [vmem:[%s183 + $0x58] sm:$0xf]
        %v215 = vld [vmem:[%s183 + $0x5c] sm:$0xf]
        %v216 = vld [vmem:[%s183 + $0x60] sm:$0xf]
        %v217 = vld [vmem:[%s183 + $0x64] sm:$0xf]
        %v218 = vld [vmem:[%s183 + $0x68] sm:$0xf]
        %v219 = vld [vmem:[%s183 + $0x6c] sm:$0xf]
        %v220 = vld [vmem:[%s183 + $0x70] sm:$0xf]
        %v221 = vld [vmem:[%s183 + $0x74] sm:$0xf]
        %v222 = vld [vmem:[%s183 + $0x78] sm:$0xf]
        %v223 = vld [vmem:[%s183 + $0x7c] sm:$0xf]
        %v224 = vld [vmem:[%s183 + $0x80] sm:$0xf]
        %v225 = vld [vmem:[%s183 + $0x84] sm:$0xf]
        %v226 = vld [vmem:[%s183 + $0x88] sm:$0xf]
        %v227 = vld [vmem:[%s183 + $0x8c] sm:$0xf]
        %v228 = vld [vmem:[%s183 + $0x90] sm:$0xf]
        %v229 = vld [vmem:[%s183 + $0x94] sm:$0xf]
        %v230 = vld [vmem:[%s183 + $0x98] sm:$0xf]
        %v231 = vld [vmem:[%s183 + $0x9c] sm:$0xf]
        %v232 = vld [vmem:[%s183 + $0xa0] sm:$0xf]
        %v233 = vld [vmem:[%s1] sm:$0x3]
        %s234 = scalar_lea.vmem %s1, 2
        %v235 = vld [vmem:[%s234] sm:$0x3]
        %v273 = vunpack.c.l.b16 %v192
        %v274 = vunpack.c.l.b16 %v193
        %v275 = vunpack.c.l.b16 %v194
        %v276 = vunpack.c.l.b16 %v195
        %v277 = vunpack.c.l.b16 %v196
        %v278 = vunpack.c.l.b16 %v197
        %v279 = vunpack.c.l.b16 %v198
        %v280 = vunpack.c.l.b16 %v199
        %v281 = vunpack.c.l.b16 %v200
        %v282 = vunpack.c.l.b16 %v201
        %v283 = vunpack.c.l.b16 %v202
        %v284 = vunpack.c.l.b16 %v203
        %v285 = vunpack.c.l.b16 %v204
        %v286 = vunpack.c.l.b16 %v205
        %v287 = vunpack.c.l.b16 %v206
        %v288 = vunpack.c.l.b16 %v207
        %v289 = vunpack.c.l.b16 %v208
        %v290 = vunpack.c.l.b16 %v209
        %v291 = vunpack.c.l.b16 %v210
        %v292 = vunpack.c.l.b16 %v211
        %v293 = vunpack.c.l.b16 %v212
        %v294 = vunpack.c.l.b16 %v213
        %v295 = vunpack.c.l.b16 %v214
        %v296 = vunpack.c.l.b16 %v215
        %v297 = vunpack.c.l.b16 %v216
        %v298 = vunpack.c.l.b16 %v217
        %v299 = vunpack.c.l.b16 %v218
        %v300 = vunpack.c.l.b16 %v219
        %v301 = vunpack.c.l.b16 %v220
        %v302 = vunpack.c.l.b16 %v221
        %v303 = vunpack.c.l.b16 %v222
        %v304 = vunpack.c.l.b16 %v223
        %v305 = vunpack.c.l.b16 %v224
        %v306 = vunpack.c.l.b16 %v225
        %v307 = vunpack.c.l.b16 %v226
        %v308 = vunpack.c.l.b16 %v227
        %v309 = vunpack.c.l.b16 %v228
        %v310 = vpack.c.b16 %v274, %v273
        %v311 = vpack.c.b16 %v276, %v275
        %v312 = vpack.c.b16 %v278, %v277
        %v313 = vpack.c.b16 %v280, %v279
        %v314 = vpack.c.b16 %v282, %v281
        %v315 = vpack.c.b16 %v284, %v283
        %v316 = vpack.c.b16 %v286, %v285
        %v317 = vpack.c.b16 %v288, %v287
        %v318 = vpack.c.b16 %v290, %v289
        %v319 = vpack.c.b16 %v292, %v291
        %v320 = vpack.c.b16 %v294, %v293
        %v321 = vpack.c.b16 %v296, %v295
        %v322 = vpack.c.b16 %v298, %v297
        %v323 = vpack.c.b16 %v300, %v299
        %v324 = vpack.c.b16 %v302, %v301
        %v325 = vpack.c.b16 %v304, %v303
        %v326 = vpack.c.b16 %v306, %v305
        %v327 = vpack.c.b16 %v308, %v307
        %v328 = vpack.c.b16 %v309, %v309
        %vm329 = vsmask.f32 7424
        %v331 = vshrl.u32 %v310, 16
        %v333 = vshll.u32 %v310, 16
        %v335 = vrot.slane %v333, 1
        %v336 = vor.u32 %v331, %v335
        %v338 = vshll.u32 %v311, 16
        %v340 = vrot.slane %v338, 1
        %v341 = vsel %vm329, %v336, %v340
        %v342 = vshrl.u32 %v311, 16
        %v344 = vor.u32 %v342, %v340
        %v346 = vshll.u32 %v312, 16
        %v348 = vrot.slane %v346, 1
        %v349 = vsel %vm329, %v344, %v348
        %v350 = vshrl.u32 %v312, 16
        %v352 = vor.u32 %v350, %v348
        %v354 = vshll.u32 %v313, 16
        %v356 = vrot.slane %v354, 1
        %v357 = vsel %vm329, %v352, %v356
        %v358 = vshrl.u32 %v313, 16
        %v360 = vor.u32 %v358, %v356
        %v362 = vshll.u32 %v314, 16
        %v364 = vrot.slane %v362, 1
        %v365 = vsel %vm329, %v360, %v364
        %v366 = vshrl.u32 %v314, 16
        %v368 = vor.u32 %v366, %v364
        %v370 = vshll.u32 %v315, 16
        %v372 = vrot.slane %v370, 1
        %v373 = vsel %vm329, %v368, %v372
        %v374 = vshrl.u32 %v315, 16
        %v376 = vor.u32 %v374, %v372
        %v378 = vshll.u32 %v316, 16
        %v380 = vrot.slane %v378, 1
        %v381 = vsel %vm329, %v376, %v380
        %v382 = vshrl.u32 %v316, 16
        %v384 = vor.u32 %v382, %v380
        %v386 = vshll.u32 %v317, 16
        %v388 = vrot.slane %v386, 1
        %v389 = vsel %vm329, %v384, %v388
        %v390 = vshrl.u32 %v317, 16
        %v392 = vor.u32 %v390, %v388
        %v394 = vshll.u32 %v318, 16
        %v396 = vrot.slane %v394, 1
        %v397 = vsel %vm329, %v392, %v396
        %v398 = vshrl.u32 %v318, 16
        %v400 = vor.u32 %v398, %v396
        %v402 = vshll.u32 %v319, 16
        %v404 = vrot.slane %v402, 1
        %v405 = vsel %vm329, %v400, %v404
        %v406 = vshrl.u32 %v319, 16
        %v408 = vor.u32 %v406, %v404
        %v410 = vshll.u32 %v320, 16
        %v412 = vrot.slane %v410, 1
        %v413 = vsel %vm329, %v408, %v412
        %v414 = vshrl.u32 %v320, 16
        %v416 = vor.u32 %v414, %v412
        %v418 = vshll.u32 %v321, 16
        %v420 = vrot.slane %v418, 1
        %v421 = vsel %vm329, %v416, %v420
        %v422 = vshrl.u32 %v321, 16
        %v424 = vor.u32 %v422, %v420
        %v426 = vshll.u32 %v322, 16
        %v428 = vrot.slane %v426, 1
        %v429 = vsel %vm329, %v424, %v428
        %v430 = vshrl.u32 %v322, 16
        %v432 = vor.u32 %v430, %v428
        %v434 = vshll.u32 %v323, 16
        %v436 = vrot.slane %v434, 1
        %v437 = vsel %vm329, %v432, %v436
        %v438 = vshrl.u32 %v323, 16
        %v440 = vor.u32 %v438, %v436
        %v442 = vshll.u32 %v324, 16
        %v444 = vrot.slane %v442, 1
        %v445 = vsel %vm329, %v440, %v444
        %v446 = vshrl.u32 %v324, 16
        %v448 = vor.u32 %v446, %v444
        %v450 = vshll.u32 %v325, 16
        %v452 = vrot.slane %v450, 1
        %v453 = vsel %vm329, %v448, %v452
        %v454 = vshrl.u32 %v325, 16
        %v456 = vor.u32 %v454, %v452
        %v458 = vshll.u32 %v326, 16
        %v460 = vrot.slane %v458, 1
        %v461 = vsel %vm329, %v456, %v460
        %v462 = vshrl.u32 %v326, 16
        %v464 = vor.u32 %v462, %v460
        %v466 = vshll.u32 %v327, 16
        %v468 = vrot.slane %v466, 1
        %v469 = vsel %vm329, %v464, %v468
        %v470 = vshrl.u32 %v327, 16
        %v472 = vor.u32 %v470, %v468
        %v474 = vshll.u32 %v328, 16
        %v476 = vrot.slane %v474, 1
        %v477 = vsel %vm329, %v472, %v476
        %vm478 = vcmask 23552
        %v480 = vsel %vm478, %v341, 0
        %v483 = vsel %vm478, %v349, 0
        %v486 = vsel %vm478, %v357, 0
        %v489 = vsel %vm478, %v365, 0
        %v492 = vsel %vm478, %v373, 0
        %v495 = vsel %vm478, %v381, 0
        %v498 = vsel %vm478, %v389, 0
        %v501 = vsel %vm478, %v397, 0
        %v504 = vsel %vm478, %v405, 0
        %v507 = vsel %vm478, %v413, 0
        %v510 = vsel %vm478, %v421, 0
        %v513 = vsel %vm478, %v429, 0
        %v516 = vsel %vm478, %v437, 0
        %v519 = vsel %vm478, %v445, 0
        %v522 = vsel %vm478, %v453, 0
        %v525 = vsel %vm478, %v461, 0
        %v528 = vsel %vm478, %v469, 0
        %v531 = vsel %vm478, %v477, 0
        %vm533 = vcmask 1040384
        %vm534 = vcmask 1041408
        %v535 = vsel %vm533, 4294967295, 65535
        %v536 = vsel %vm534, %v535, 0
        %v538 = vand.u32 %v235, %v536
        %540 = vmatpush.bf16.msra.mxu0 0
        %541 = vmatpush.bf16.msra.mxu0 0
        %542 = vmatpush.bf16.msra.mxu0 0
        %543 = vmatpush.bf16.msra.mxu0 0
        %544 = vmatpush.bf16.msra.mxu0 0
        %545 = vmatpush.bf16.msra.mxu0 0
        %546 = vmatpush.bf16.msra.mxu0 0
        %547 = vmatpush.bf16.msra.mxu0 %v538
        %548 = vmatmul.bf16.gmra.mxu0 %v480
        %v549 = vpop.f32.mrf.mxu0
        %v550 = vadd.f32 0.0, %v549
        %v551 = vpop.f32.mrf.mxu0
        %v552 = vadd.f32 0.0, %v551
        %553 = vmatmul.bf16.gmra.mxu0 %v483
        %v554 = vpop.f32.mrf.mxu0
        %v555 = vadd.f32 0.0, %v554
        %v556 = vpop.f32.mrf.mxu0
        %v557 = vadd.f32 0.0, %v556
        %558 = vmatmul.bf16.gmra.mxu0 %v486
        %v559 = vpop.f32.mrf.mxu0
        %v560 = vadd.f32 0.0, %v559
        %v561 = vpop.f32.mrf.mxu0
        %v562 = vadd.f32 0.0, %v561
        %563 = vmatmul.bf16.gmra.mxu0 %v489
        %v564 = vpop.f32.mrf.mxu0
        %v565 = vadd.f32 0.0, %v564
        %v566 = vpop.f32.mrf.mxu0
        %v567 = vadd.f32 0.0, %v566
        %568 = vmatmul.bf16.gmra.mxu0 %v492
        %v569 = vpop.f32.mrf.mxu0
        %v570 = vadd.f32 0.0, %v569
        %v571 = vpop.f32.mrf.mxu0
        %v572 = vadd.f32 0.0, %v571
        %573 = vmatmul.bf16.gmra.mxu0 %v495
        %v574 = vpop.f32.mrf.mxu0
        %v575 = vadd.f32 0.0, %v574
        %v576 = vpop.f32.mrf.mxu0
        %v577 = vadd.f32 0.0, %v576
        %578 = vmatmul.bf16.gmra.mxu0 %v498
        %v579 = vpop.f32.mrf.mxu0
        %v580 = vadd.f32 0.0, %v579
        %v581 = vpop.f32.mrf.mxu0
        %v582 = vadd.f32 0.0, %v581
        %583 = vmatmul.bf16.gmra.mxu0 %v501
        %v584 = vpop.f32.mrf.mxu0
        %v585 = vadd.f32 0.0, %v584
        %v586 = vpop.f32.mrf.mxu0
        %v587 = vadd.f32 0.0, %v586
        %588 = vmatmul.bf16.gmra.mxu0 %v504
        %v589 = vpop.f32.mrf.mxu0
        %v590 = vadd.f32 0.0, %v589
        %v591 = vpop.f32.mrf.mxu0
        %v592 = vadd.f32 0.0, %v591
        %593 = vmatmul.bf16.gmra.mxu0 %v507
        %v594 = vpop.f32.mrf.mxu0
        %v595 = vadd.f32 0.0, %v594
        %v596 = vpop.f32.mrf.mxu0
        %v597 = vadd.f32 0.0, %v596
        %598 = vmatmul.bf16.gmra.mxu0 %v510
        %v599 = vpop.f32.mrf.mxu0
        %v600 = vadd.f32 0.0, %v599
        %v601 = vpop.f32.mrf.mxu0
        %v602 = vadd.f32 0.0, %v601
        %603 = vmatmul.bf16.gmra.mxu0 %v513
        %v604 = vpop.f32.mrf.mxu0
        %v605 = vadd.f32 0.0, %v604
        %v606 = vpop.f32.mrf.mxu0
        %v607 = vadd.f32 0.0, %v606
        %608 = vmatmul.bf16.gmra.mxu0 %v516
        %v609 = vpop.f32.mrf.mxu0
        %v610 = vadd.f32 0.0, %v609
        %v611 = vpop.f32.mrf.mxu0
        %v612 = vadd.f32 0.0, %v611
        %613 = vmatmul.bf16.gmra.mxu0 %v519
        %v614 = vpop.f32.mrf.mxu0
        %v615 = vadd.f32 0.0, %v614
        %v616 = vpop.f32.mrf.mxu0
        %v617 = vadd.f32 0.0, %v616
        %618 = vmatmul.bf16.gmra.mxu0 %v522
        %v619 = vpop.f32.mrf.mxu0
        %v620 = vadd.f32 0.0, %v619
        %v621 = vpop.f32.mrf.mxu0
        %v622 = vadd.f32 0.0, %v621
        %623 = vmatmul.bf16.gmra.mxu0 %v525
        %v624 = vpop.f32.mrf.mxu0
        %v625 = vadd.f32 0.0, %v624
        %v626 = vpop.f32.mrf.mxu0
        %v627 = vadd.f32 0.0, %v626
        %628 = vmatmul.bf16.gmra.mxu0 %v528
        %v629 = vpop.f32.mrf.mxu0
        %v630 = vadd.f32 0.0, %v629
        %v631 = vpop.f32.mrf.mxu0
        %v632 = vadd.f32 0.0, %v631
        %633 = vmatmul.bf16.gmra.mxu0 %v531
        %v634 = vpop.f32.mrf.mxu0
        %v635 = vadd.f32 0.0, %v634
        %v636 = vpop.f32.mrf.mxu0
        %v637 = vadd.f32 0.0, %v636
        %638 = vdwg.mxu0
        %v639 = vsel %vm478, %v310, 0
        %v641 = vsel %vm478, %v311, 0
        %v643 = vsel %vm478, %v312, 0
        %v645 = vsel %vm478, %v313, 0
        %v647 = vsel %vm478, %v314, 0
        %v649 = vsel %vm478, %v315, 0
        %v651 = vsel %vm478, %v316, 0
        %v653 = vsel %vm478, %v317, 0
        %v655 = vsel %vm478, %v318, 0
        %v657 = vsel %vm478, %v319, 0
        %v659 = vsel %vm478, %v320, 0
        %v661 = vsel %vm478, %v321, 0
        %v663 = vsel %vm478, %v322, 0
        %v665 = vsel %vm478, %v323, 0
        %v667 = vsel %vm478, %v324, 0
        %v669 = vsel %vm478, %v325, 0
        %v671 = vsel %vm478, %v326, 0
        %v673 = vsel %vm478, %v327, 0
        %v676 = vand.u32 %v233, %v536
        %678 = vmatpush.bf16.msra.mxu0 0
        %679 = vmatpush.bf16.msra.mxu0 0
        %680 = vmatpush.bf16.msra.mxu0 0
        %681 = vmatpush.bf16.msra.mxu0 0
        %682 = vmatpush.bf16.msra.mxu0 0
        %683 = vmatpush.bf16.msra.mxu0 0
        %684 = vmatpush.bf16.msra.mxu0 0
        %685 = vmatpush.bf16.msra.mxu0 %v676
        %686 = vmatmul.bf16.gmra.mxu0 %v639
        %v687 = vpop.f32.mrf.mxu0
        %v688 = vadd.f32 %v550, %v687
        %v689 = vpop.f32.mrf.mxu0
        %v690 = vadd.f32 %v552, %v689
        %691 = vmatmul.bf16.gmra.mxu0 %v641
        %v692 = vpop.f32.mrf.mxu0
        %v693 = vadd.f32 %v555, %v692
        %v694 = vpop.f32.mrf.mxu0
        %v695 = vadd.f32 %v557, %v694
        %696 = vmatmul.bf16.gmra.mxu0 %v643
        %v697 = vpop.f32.mrf.mxu0
        %v698 = vadd.f32 %v560, %v697
        %v699 = vpop.f32.mrf.mxu0
        %v700 = vadd.f32 %v562, %v699
        %701 = vmatmul.bf16.gmra.mxu0 %v645
        %v702 = vpop.f32.mrf.mxu0
        %v703 = vadd.f32 %v565, %v702
        %v704 = vpop.f32.mrf.mxu0
        %v705 = vadd.f32 %v567, %v704
        %706 = vmatmul.bf16.gmra.mxu0 %v647
        %v707 = vpop.f32.mrf.mxu0
        %v708 = vadd.f32 %v570, %v707
        %v709 = vpop.f32.mrf.mxu0
        %v710 = vadd.f32 %v572, %v709
        %711 = vmatmul.bf16.gmra.mxu0 %v649
        %v712 = vpop.f32.mrf.mxu0
        %v713 = vadd.f32 %v575, %v712
        %v714 = vpop.f32.mrf.mxu0
        %v715 = vadd.f32 %v577, %v714
        %716 = vmatmul.bf16.gmra.mxu0 %v651
        %v717 = vpop.f32.mrf.mxu0
        %v718 = vadd.f32 %v580, %v717
        %v719 = vpop.f32.mrf.mxu0
        %v720 = vadd.f32 %v582, %v719
        %721 = vmatmul.bf16.gmra.mxu0 %v653
        %v722 = vpop.f32.mrf.mxu0
        %v723 = vadd.f32 %v585, %v722
        %v724 = vpop.f32.mrf.mxu0
        %v725 = vadd.f32 %v587, %v724
        %726 = vmatmul.bf16.gmra.mxu0 %v655
        %v727 = vpop.f32.mrf.mxu0
        %v728 = vadd.f32 %v590, %v727
        %v729 = vpop.f32.mrf.mxu0
        %v730 = vadd.f32 %v592, %v729
        %731 = vmatmul.bf16.gmra.mxu0 %v657
        %v732 = vpop.f32.mrf.mxu0
        %v733 = vadd.f32 %v595, %v732
        %v734 = vpop.f32.mrf.mxu0
        %v735 = vadd.f32 %v597, %v734
        %736 = vmatmul.bf16.gmra.mxu0 %v659
        %v737 = vpop.f32.mrf.mxu0
        %v738 = vadd.f32 %v600, %v737
        %v739 = vpop.f32.mrf.mxu0
        %v740 = vadd.f32 %v602, %v739
        %741 = vmatmul.bf16.gmra.mxu0 %v661
        %v742 = vpop.f32.mrf.mxu0
        %v743 = vadd.f32 %v605, %v742
        %v744 = vpop.f32.mrf.mxu0
        %v745 = vadd.f32 %v607, %v744
        %746 = vmatmul.bf16.gmra.mxu0 %v663
        %v747 = vpop.f32.mrf.mxu0
        %v748 = vadd.f32 %v610, %v747
        %v749 = vpop.f32.mrf.mxu0
        %v750 = vadd.f32 %v612, %v749
        %751 = vmatmul.bf16.gmra.mxu0 %v665
        %v752 = vpop.f32.mrf.mxu0
        %v753 = vadd.f32 %v615, %v752
        %v754 = vpop.f32.mrf.mxu0
        %v755 = vadd.f32 %v617, %v754
        %756 = vmatmul.bf16.gmra.mxu0 %v667
        %v757 = vpop.f32.mrf.mxu0
        %v758 = vadd.f32 %v620, %v757
        %v759 = vpop.f32.mrf.mxu0
        %v760 = vadd.f32 %v622, %v759
        %761 = vmatmul.bf16.gmra.mxu0 %v669
        %v762 = vpop.f32.mrf.mxu0
        %v763 = vadd.f32 %v625, %v762
        %v764 = vpop.f32.mrf.mxu0
        %v765 = vadd.f32 %v627, %v764
        %766 = vmatmul.bf16.gmra.mxu0 %v671
        %v767 = vpop.f32.mrf.mxu0
        %v768 = vadd.f32 %v630, %v767
        %v769 = vpop.f32.mrf.mxu0
        %v770 = vadd.f32 %v632, %v769
        %771 = vmatmul.bf16.gmra.mxu0 %v673
        %v772 = vpop.f32.mrf.mxu0
        %v773 = vadd.f32 %v635, %v772
        %v774 = vpop.f32.mrf.mxu0
        %v775 = vadd.f32 %v637, %v774
        %776 = vdwg.mxu0
        %s777 = scalar_lea.vmem %s1, 4
        %v778 = vld [vmem:[%s777] sm:$0x3]
        %vm779 = vcmask 1046528
        %v780 = vrot.slane %v310, 1
        %v781 = vrot.slane %v311, 1
        %v782 = vsel %vm779, %v780, %v781
        %v783 = vrot.slane %v312, 1
        %v784 = vsel %vm779, %v781, %v783
        %v785 = vrot.slane %v313, 1
        %v786 = vsel %vm779, %v783, %v785
        %v787 = vrot.slane %v314, 1
        %v788 = vsel %vm779, %v785, %v787
        %v789 = vrot.slane %v315, 1
        %v790 = vsel %vm779, %v787, %v789
        %v791 = vrot.slane %v316, 1
        %v792 = vsel %vm779, %v789, %v791
        %v793 = vrot.slane %v317, 1
        %v794 = vsel %vm779, %v791, %v793
        %v795 = vrot.slane %v318, 1
        %v796 = vsel %vm779, %v793, %v795
        %v797 = vrot.slane %v319, 1
        %v798 = vsel %vm779, %v795, %v797
        %v799 = vrot.slane %v320, 1
        %v800 = vsel %vm779, %v797, %v799
        %v801 = vrot.slane %v321, 1
        %v802 = vsel %vm779, %v799, %v801
        %v803 = vrot.slane %v322, 1
        %v804 = vsel %vm779, %v801, %v803
        %v805 = vrot.slane %v323, 1
        %v806 = vsel %vm779, %v803, %v805
        %v807 = vrot.slane %v324, 1
        %v808 = vsel %vm779, %v805, %v807
        %v809 = vrot.slane %v325, 1
        %v810 = vsel %vm779, %v807, %v809
        %v811 = vrot.slane %v326, 1
        %v812 = vsel %vm779, %v809, %v811
        %v813 = vrot.slane %v327, 1
        %v814 = vsel %vm779, %v811, %v813
        %v815 = vrot.slane %v328, 1
        %v816 = vsel %vm779, %v813, %v815
        %v818 = vsel %vm478, %v782, 0
        %v821 = vsel %vm478, %v784, 0
        %v824 = vsel %vm478, %v786, 0
        %v827 = vsel %vm478, %v788, 0
        %v830 = vsel %vm478, %v790, 0
        %v833 = vsel %vm478, %v792, 0
        %v836 = vsel %vm478, %v794, 0
        %v839 = vsel %vm478, %v796, 0
        %v842 = vsel %vm478, %v798, 0
        %v845 = vsel %vm478, %v800, 0
        %v848 = vsel %vm478, %v802, 0
        %v851 = vsel %vm478, %v804, 0
        %v854 = vsel %vm478, %v806, 0
        %v857 = vsel %vm478, %v808, 0
        %v860 = vsel %vm478, %v810, 0
        %v863 = vsel %vm478, %v812, 0
        %v866 = vsel %vm478, %v814, 0
        %v869 = vsel %vm478, %v816, 0
        %v872 = vand.u32 %v778, %v536
        %874 = vmatpush.bf16.msra.mxu0 0
        %875 = vmatpush.bf16.msra.mxu0 0
        %876 = vmatpush.bf16.msra.mxu0 0
        %877 = vmatpush.bf16.msra.mxu0 0
        %878 = vmatpush.bf16.msra.mxu0 0
        %879 = vmatpush.bf16.msra.mxu0 0
        %880 = vmatpush.bf16.msra.mxu0 0
        %881 = vmatpush.bf16.msra.mxu0 %v872
        %882 = vmatmul.bf16.gmra.mxu0 %v818
        %v883 = vpop.f32.mrf.mxu0
        %v884 = vadd.f32 0.0, %v883
        %v885 = vpop.f32.mrf.mxu0
        %v886 = vadd.f32 0.0, %v885
        %887 = vmatmul.bf16.gmra.mxu0 %v821
        %v888 = vpop.f32.mrf.mxu0
        %v889 = vadd.f32 0.0, %v888
        %v890 = vpop.f32.mrf.mxu0
        %v891 = vadd.f32 0.0, %v890
        %892 = vmatmul.bf16.gmra.mxu0 %v824
        %v893 = vpop.f32.mrf.mxu0
        %v894 = vadd.f32 0.0, %v893
        %v895 = vpop.f32.mrf.mxu0
        %v896 = vadd.f32 0.0, %v895
        %897 = vmatmul.bf16.gmra.mxu0 %v827
        %v898 = vpop.f32.mrf.mxu0
        %v899 = vadd.f32 0.0, %v898
        %v900 = vpop.f32.mrf.mxu0
        %v901 = vadd.f32 0.0, %v900
        %902 = vmatmul.bf16.gmra.mxu0 %v830
        %v903 = vpop.f32.mrf.mxu0
        %v904 = vadd.f32 0.0, %v903
        %v905 = vpop.f32.mrf.mxu0
        %v906 = vadd.f32 0.0, %v905
        %907 = vmatmul.bf16.gmra.mxu0 %v833
        %v908 = vpop.f32.mrf.mxu0
        %v909 = vadd.f32 0.0, %v908
        %v910 = vpop.f32.mrf.mxu0
        %v911 = vadd.f32 0.0, %v910
        %912 = vmatmul.bf16.gmra.mxu0 %v836
        %v913 = vpop.f32.mrf.mxu0
        %v914 = vadd.f32 0.0, %v913
        %v915 = vpop.f32.mrf.mxu0
        %v916 = vadd.f32 0.0, %v915
        %917 = vmatmul.bf16.gmra.mxu0 %v839
        %v918 = vpop.f32.mrf.mxu0
        %v919 = vadd.f32 0.0, %v918
        %v920 = vpop.f32.mrf.mxu0
        %v921 = vadd.f32 0.0, %v920
        %922 = vmatmul.bf16.gmra.mxu0 %v842
        %v923 = vpop.f32.mrf.mxu0
        %v924 = vadd.f32 0.0, %v923
        %v925 = vpop.f32.mrf.mxu0
        %v926 = vadd.f32 0.0, %v925
        %927 = vmatmul.bf16.gmra.mxu0 %v845
        %v928 = vpop.f32.mrf.mxu0
        %v929 = vadd.f32 0.0, %v928
        %v930 = vpop.f32.mrf.mxu0
        %v931 = vadd.f32 0.0, %v930
        %932 = vmatmul.bf16.gmra.mxu0 %v848
        %v933 = vpop.f32.mrf.mxu0
        %v934 = vadd.f32 0.0, %v933
        %v935 = vpop.f32.mrf.mxu0
        %v936 = vadd.f32 0.0, %v935
        %937 = vmatmul.bf16.gmra.mxu0 %v851
        %v938 = vpop.f32.mrf.mxu0
        %v939 = vadd.f32 0.0, %v938
        %v940 = vpop.f32.mrf.mxu0
        %v941 = vadd.f32 0.0, %v940
        %942 = vmatmul.bf16.gmra.mxu0 %v854
        %v943 = vpop.f32.mrf.mxu0
        %v944 = vadd.f32 0.0, %v943
        %v945 = vpop.f32.mrf.mxu0
        %v946 = vadd.f32 0.0, %v945
        %947 = vmatmul.bf16.gmra.mxu0 %v857
        %v948 = vpop.f32.mrf.mxu0
        %v949 = vadd.f32 0.0, %v948
        %v950 = vpop.f32.mrf.mxu0
        %v951 = vadd.f32 0.0, %v950
        %952 = vmatmul.bf16.gmra.mxu0 %v860
        %v953 = vpop.f32.mrf.mxu0
        %v954 = vadd.f32 0.0, %v953
        %v955 = vpop.f32.mrf.mxu0
        %v956 = vadd.f32 0.0, %v955
        %957 = vmatmul.bf16.gmra.mxu0 %v863
        %v958 = vpop.f32.mrf.mxu0
        %v959 = vadd.f32 0.0, %v958
        %v960 = vpop.f32.mrf.mxu0
        %v961 = vadd.f32 0.0, %v960
        %962 = vmatmul.bf16.gmra.mxu0 %v866
        %v963 = vpop.f32.mrf.mxu0
        %v964 = vadd.f32 0.0, %v963
        %v965 = vpop.f32.mrf.mxu0
        %v966 = vadd.f32 0.0, %v965
        %967 = vmatmul.bf16.gmra.mxu0 %v869
        %v968 = vpop.f32.mrf.mxu0
        %v969 = vadd.f32 0.0, %v968
        %v970 = vpop.f32.mrf.mxu0
        %v971 = vadd.f32 0.0, %v970
        %972 = vdwg.mxu0
        %v973 = vadd.f32 %v688, %v884
        %v974 = vadd.f32 %v690, %v886
        %v975 = vadd.f32 %v693, %v889
        %v976 = vadd.f32 %v695, %v891
        %v977 = vadd.f32 %v698, %v894
        %v978 = vadd.f32 %v700, %v896
        %v979 = vadd.f32 %v703, %v899
        %v980 = vadd.f32 %v705, %v901
        %v981 = vadd.f32 %v708, %v904
        %v982 = vadd.f32 %v710, %v906
        %v983 = vadd.f32 %v713, %v909
        %v984 = vadd.f32 %v715, %v911
        %v985 = vadd.f32 %v718, %v914
        %v986 = vadd.f32 %v720, %v916
        %v987 = vadd.f32 %v723, %v919
        %v988 = vadd.f32 %v725, %v921
        %v989 = vadd.f32 %v728, %v924
        %v990 = vadd.f32 %v730, %v926
        %v991 = vadd.f32 %v733, %v929
        %v992 = vadd.f32 %v735, %v931
        %v993 = vadd.f32 %v738, %v934
        %v994 = vadd.f32 %v740, %v936
        %v995 = vadd.f32 %v743, %v939
        %v996 = vadd.f32 %v745, %v941
        %v997 = vadd.f32 %v748, %v944
        %v998 = vadd.f32 %v750, %v946
        %v999 = vadd.f32 %v753, %v949
        %v1000 = vadd.f32 %v755, %v951
        %v1001 = vadd.f32 %v758, %v954
        %v1002 = vadd.f32 %v760, %v956
        %v1003 = vadd.f32 %v763, %v959
        %v1004 = vadd.f32 %v765, %v961
        %v1005 = vadd.f32 %v768, %v964
        %v1006 = vadd.f32 %v770, %v966
        %v1007 = vadd.f32 %v773, %v969
        %v1008 = vadd.f32 %v775, %v971
        %s1009 = scalar_lea.vmem %s1, 6
        %v1010 = vld [vmem:[%s1009] sm:$0x3]
        %v1013 = vunpack.c.l.b16 %v229
        %v1014 = vunpack.c.l.b16 %v230
        %v1015 = vpack.c.b16 %v1013, %v309
        %v1016 = vpack.c.b16 %v1014, %v1014
        %v1017 = vrot.slane %v1015, 1
        %v1018 = vsel %vm779, %v813, %v1017
        %v1019 = vrot.slane %v1016, 1
        %v1020 = vsel %vm779, %v1017, %v1019
        %v1022 = vsel %vm478, %v1018, 0
        %v1025 = vsel %vm478, %v1020, 0
        %v1028 = vand.u32 %v1010, %v536
        %1030 = vmatpush.bf16.msra.mxu0 0
        %1031 = vmatpush.bf16.msra.mxu0 0
        %1032 = vmatpush.bf16.msra.mxu0 0
        %1033 = vmatpush.bf16.msra.mxu0 0
        %1034 = vmatpush.bf16.msra.mxu0 0
        %1035 = vmatpush.bf16.msra.mxu0 0
        %1036 = vmatpush.bf16.msra.mxu0 0
        %1037 = vmatpush.bf16.msra.mxu0 %v1028
        %1038 = vmatmul.bf16.gmra.mxu0 %v821
        %v1039 = vpop.f32.mrf.mxu0
        %v1040 = vadd.f32 0.0, %v1039
        %v1041 = vpop.f32.mrf.mxu0
        %v1042 = vadd.f32 0.0, %v1041
        %1043 = vmatmul.bf16.gmra.mxu0 %v824
        %v1044 = vpop.f32.mrf.mxu0
        %v1045 = vadd.f32 0.0, %v1044
        %v1046 = vpop.f32.mrf.mxu0
        %v1047 = vadd.f32 0.0, %v1046
        %1048 = vmatmul.bf16.gmra.mxu0 %v827
        %v1049 = vpop.f32.mrf.mxu0
        %v1050 = vadd.f32 0.0, %v1049
        %v1051 = vpop.f32.mrf.mxu0
        %v1052 = vadd.f32 0.0, %v1051
        %1053 = vmatmul.bf16.gmra.mxu0 %v830
        %v1054 = vpop.f32.mrf.mxu0
        %v1055 = vadd.f32 0.0, %v1054
        %v1056 = vpop.f32.mrf.mxu0
        %v1057 = vadd.f32 0.0, %v1056
        %1058 = vmatmul.bf16.gmra.mxu0 %v833
        %v1059 = vpop.f32.mrf.mxu0
        %v1060 = vadd.f32 0.0, %v1059
        %v1061 = vpop.f32.mrf.mxu0
        %v1062 = vadd.f32 0.0, %v1061
        %1063 = vmatmul.bf16.gmra.mxu0 %v836
        %v1064 = vpop.f32.mrf.mxu0
        %v1065 = vadd.f32 0.0, %v1064
        %v1066 = vpop.f32.mrf.mxu0
        %v1067 = vadd.f32 0.0, %v1066
        %1068 = vmatmul.bf16.gmra.mxu0 %v839
        %v1069 = vpop.f32.mrf.mxu0
        %v1070 = vadd.f32 0.0, %v1069
        %v1071 = vpop.f32.mrf.mxu0
        %v1072 = vadd.f32 0.0, %v1071
        %1073 = vmatmul.bf16.gmra.mxu0 %v842
        %v1074 = vpop.f32.mrf.mxu0
        %v1075 = vadd.f32 0.0, %v1074
        %v1076 = vpop.f32.mrf.mxu0
        %v1077 = vadd.f32 0.0, %v1076
        %1078 = vmatmul.bf16.gmra.mxu0 %v845
        %v1079 = vpop.f32.mrf.mxu0
        %v1080 = vadd.f32 0.0, %v1079
        %v1081 = vpop.f32.mrf.mxu0
        %v1082 = vadd.f32 0.0, %v1081
        %1083 = vmatmul.bf16.gmra.mxu0 %v848
        %v1084 = vpop.f32.mrf.mxu0
        %v1085 = vadd.f32 0.0, %v1084
        %v1086 = vpop.f32.mrf.mxu0
        %v1087 = vadd.f32 0.0, %v1086
        %1088 = vmatmul.bf16.gmra.mxu0 %v851
        %v1089 = vpop.f32.mrf.mxu0
        %v1090 = vadd.f32 0.0, %v1089
        %v1091 = vpop.f32.mrf.mxu0
        %v1092 = vadd.f32 0.0, %v1091
        %1093 = vmatmul.bf16.gmra.mxu0 %v854
        %v1094 = vpop.f32.mrf.mxu0
        %v1095 = vadd.f32 0.0, %v1094
        %v1096 = vpop.f32.mrf.mxu0
        %v1097 = vadd.f32 0.0, %v1096
        %1098 = vmatmul.bf16.gmra.mxu0 %v857
        %v1099 = vpop.f32.mrf.mxu0
        %v1100 = vadd.f32 0.0, %v1099
        %v1101 = vpop.f32.mrf.mxu0
        %v1102 = vadd.f32 0.0, %v1101
        %1103 = vmatmul.bf16.gmra.mxu0 %v860
        %v1104 = vpop.f32.mrf.mxu0
        %v1105 = vadd.f32 0.0, %v1104
        %v1106 = vpop.f32.mrf.mxu0
        %v1107 = vadd.f32 0.0, %v1106
        %1108 = vmatmul.bf16.gmra.mxu0 %v863
        %v1109 = vpop.f32.mrf.mxu0
        %v1110 = vadd.f32 0.0, %v1109
        %v1111 = vpop.f32.mrf.mxu0
        %v1112 = vadd.f32 0.0, %v1111
        %1113 = vmatmul.bf16.gmra.mxu0 %v866
        %v1114 = vpop.f32.mrf.mxu0
        %v1115 = vadd.f32 0.0, %v1114
        %v1116 = vpop.f32.mrf.mxu0
        %v1117 = vadd.f32 0.0, %v1116
        %1118 = vmatmul.bf16.gmra.mxu0 %v1022
        %v1119 = vpop.f32.mrf.mxu0
        %v1120 = vadd.f32 0.0, %v1119
        %v1121 = vpop.f32.mrf.mxu0
        %v1122 = vadd.f32 0.0, %v1121
        %1123 = vmatmul.bf16.gmra.mxu0 %v1025
        %v1124 = vpop.f32.mrf.mxu0
        %v1125 = vadd.f32 0.0, %v1124
        %v1126 = vpop.f32.mrf.mxu0
        %v1127 = vadd.f32 0.0, %v1126
        %1128 = vdwg.mxu0
        %v1129 = vadd.f32 %v973, %v1040
        %v1130 = vadd.f32 %v974, %v1042
        %v1131 = vadd.f32 %v975, %v1045
        %v1132 = vadd.f32 %v976, %v1047
        %v1133 = vadd.f32 %v977, %v1050
        %v1134 = vadd.f32 %v978, %v1052
        %v1135 = vadd.f32 %v979, %v1055
        %v1136 = vadd.f32 %v980, %v1057
        %v1137 = vadd.f32 %v981, %v1060
        %v1138 = vadd.f32 %v982, %v1062
        %v1139 = vadd.f32 %v983, %v1065
        %v1140 = vadd.f32 %v984, %v1067
        %v1141 = vadd.f32 %v985, %v1070
        %v1142 = vadd.f32 %v986, %v1072
        %v1143 = vadd.f32 %v987, %v1075
        %v1144 = vadd.f32 %v988, %v1077
        %v1145 = vadd.f32 %v989, %v1080
        %v1146 = vadd.f32 %v990, %v1082
        %v1147 = vadd.f32 %v991, %v1085
        %v1148 = vadd.f32 %v992, %v1087
        %v1149 = vadd.f32 %v993, %v1090
        %v1150 = vadd.f32 %v994, %v1092
        %v1151 = vadd.f32 %v995, %v1095
        %v1152 = vadd.f32 %v996, %v1097
        %v1153 = vadd.f32 %v997, %v1100
        %v1154 = vadd.f32 %v998, %v1102
        %v1155 = vadd.f32 %v999, %v1105
        %v1156 = vadd.f32 %v1000, %v1107
        %v1157 = vadd.f32 %v1001, %v1110
        %v1158 = vadd.f32 %v1002, %v1112
        %v1159 = vadd.f32 %v1003, %v1115
        %v1160 = vadd.f32 %v1004, %v1117
        %v1161 = vadd.f32 %v1005, %v1120
        %v1162 = vadd.f32 %v1006, %v1122
        %v1163 = vadd.f32 %v1007, %v1125
        %v1164 = vadd.f32 %v1008, %v1127
        %s1165 = scalar_lea.vmem %s1, 8
        %v1166 = vld [vmem:[%s1165] sm:$0x3]
        %vm1167 = vsmask.f32 6400
        %v1168 = vrot.slane %v342, 1
        %v1169 = vrot.slane %v338, 2
        %v1170 = vor.u32 %v1168, %v1169
        %v1171 = vrot.slane %v350, 1
        %v1172 = vrot.slane %v346, 2
        %v1173 = vor.u32 %v1171, %v1172
        %v1174 = vsel %vm1167, %v1170, %v1173
        %v1175 = vrot.slane %v358, 1
        %v1176 = vrot.slane %v354, 2
        %v1177 = vor.u32 %v1175, %v1176
        %v1178 = vsel %vm1167, %v1173, %v1177
        %v1179 = vrot.slane %v366, 1
        %v1180 = vrot.slane %v362, 2
        %v1181 = vor.u32 %v1179, %v1180
        %v1182 = vsel %vm1167, %v1177, %v1181
        %v1183 = vrot.slane %v374, 1
        %v1184 = vrot.slane %v370, 2
        %v1185 = vor.u32 %v1183, %v1184
        %v1186 = vsel %vm1167, %v1181, %v1185
        %v1187 = vrot.slane %v382, 1
        %v1188 = vrot.slane %v378, 2
        %v1189 = vor.u32 %v1187, %v1188
        %v1190 = vsel %vm1167, %v1185, %v1189
        %v1191 = vrot.slane %v390, 1
        %v1192 = vrot.slane %v386, 2
        %v1193 = vor.u32 %v1191, %v1192
        %v1194 = vsel %vm1167, %v1189, %v1193
        %v1195 = vrot.slane %v398, 1
        %v1196 = vrot.slane %v394, 2
        %v1197 = vor.u32 %v1195, %v1196
        %v1198 = vsel %vm1167, %v1193, %v1197
        %v1199 = vrot.slane %v406, 1
        %v1200 = vrot.slane %v402, 2
        %v1201 = vor.u32 %v1199, %v1200
        %v1202 = vsel %vm1167, %v1197, %v1201
        %v1203 = vrot.slane %v414, 1
        %v1204 = vrot.slane %v410, 2
        %v1205 = vor.u32 %v1203, %v1204
        %v1206 = vsel %vm1167, %v1201, %v1205
        %v1207 = vrot.slane %v422, 1
        %v1208 = vrot.slane %v418, 2
        %v1209 = vor.u32 %v1207, %v1208
        %v1210 = vsel %vm1167, %v1205, %v1209
        %v1211 = vrot.slane %v430, 1
        %v1212 = vrot.slane %v426, 2
        %v1213 = vor.u32 %v1211, %v1212
        %v1214 = vsel %vm1167, %v1209, %v1213
        %v1215 = vrot.slane %v438, 1
        %v1216 = vrot.slane %v434, 2
        %v1217 = vor.u32 %v1215, %v1216
        %v1218 = vsel %vm1167, %v1213, %v1217
        %v1219 = vrot.slane %v446, 1
        %v1220 = vrot.slane %v442, 2
        %v1221 = vor.u32 %v1219, %v1220
        %v1222 = vsel %vm1167, %v1217, %v1221
        %v1223 = vrot.slane %v454, 1
        %v1224 = vrot.slane %v450, 2
        %v1225 = vor.u32 %v1223, %v1224
        %v1226 = vsel %vm1167, %v1221, %v1225
        %v1227 = vrot.slane %v462, 1
        %v1228 = vrot.slane %v458, 2
        %v1229 = vor.u32 %v1227, %v1228
        %v1230 = vsel %vm1167, %v1225, %v1229
        %v1231 = vrot.slane %v470, 1
        %v1232 = vrot.slane %v466, 2
        %v1233 = vor.u32 %v1231, %v1232
        %v1234 = vsel %vm1167, %v1229, %v1233
        %v1236 = vshrl.u32 %v1015, 16
        %v1238 = vrot.slane %v1236, 1
        %v1239 = vshll.u32 %v1015, 16
        %v1241 = vrot.slane %v1239, 2
        %v1242 = vor.u32 %v1238, %v1241
        %v1243 = vsel %vm1167, %v1233, %v1242
        %v1245 = vshrl.u32 %v1016, 16
        %v1247 = vrot.slane %v1245, 1
        %v1248 = vshll.u32 %v1016, 16
        %v1250 = vrot.slane %v1248, 2
        %v1251 = vor.u32 %v1247, %v1250
        %v1252 = vsel %vm1167, %v1242, %v1251
        %v1254 = vsel %vm478, %v1174, 0
        %v1257 = vsel %vm478, %v1178, 0
        %v1260 = vsel %vm478, %v1182, 0
        %v1263 = vsel %vm478, %v1186, 0
        %v1266 = vsel %vm478, %v1190, 0
        %v1269 = vsel %vm478, %v1194, 0
        %v1272 = vsel %vm478, %v1198, 0
        %v1275 = vsel %vm478, %v1202, 0
        %v1278 = vsel %vm478, %v1206, 0
        %v1281 = vsel %vm478, %v1210, 0
        %v1284 = vsel %vm478, %v1214, 0
        %v1287 = vsel %vm478, %v1218, 0
        %v1290 = vsel %vm478, %v1222, 0
        %v1293 = vsel %vm478, %v1226, 0
        %v1296 = vsel %vm478, %v1230, 0
        %v1299 = vsel %vm478, %v1234, 0
        %v1302 = vsel %vm478, %v1243, 0
        %v1305 = vsel %vm478, %v1252, 0
        %v1308 = vand.u32 %v1166, %v536
        %1310 = vmatpush.bf16.msra.mxu0 0
        %1311 = vmatpush.bf16.msra.mxu0 0
        %1312 = vmatpush.bf16.msra.mxu0 0
        %1313 = vmatpush.bf16.msra.mxu0 0
        %1314 = vmatpush.bf16.msra.mxu0 0
        %1315 = vmatpush.bf16.msra.mxu0 0
        %1316 = vmatpush.bf16.msra.mxu0 0
        %1317 = vmatpush.bf16.msra.mxu0 %v1308
        %1318 = vmatmul.bf16.gmra.mxu0 %v1254
        %v1319 = vpop.f32.mrf.mxu0
        %v1320 = vadd.f32 0.0, %v1319
        %v1321 = vpop.f32.mrf.mxu0
        %v1322 = vadd.f32 0.0, %v1321
        %1323 = vmatmul.bf16.gmra.mxu0 %v1257
        %v1324 = vpop.f32.mrf.mxu0
        %v1325 = vadd.f32 0.0, %v1324
        %v1326 = vpop.f32.mrf.mxu0
        %v1327 = vadd.f32 0.0, %v1326
        %1328 = vmatmul.bf16.gmra.mxu0 %v1260
        %v1329 = vpop.f32.mrf.mxu0
        %v1330 = vadd.f32 0.0, %v1329
        %v1331 = vpop.f32.mrf.mxu0
        %v1332 = vadd.f32 0.0, %v1331
        %1333 = vmatmul.bf16.gmra.mxu0 %v1263
        %v1334 = vpop.f32.mrf.mxu0
        %v1335 = vadd.f32 0.0, %v1334
        %v1336 = vpop.f32.mrf.mxu0
        %v1337 = vadd.f32 0.0, %v1336
        %1338 = vmatmul.bf16.gmra.mxu0 %v1266
        %v1339 = vpop.f32.mrf.mxu0
        %v1340 = vadd.f32 0.0, %v1339
        %v1341 = vpop.f32.mrf.mxu0
        %v1342 = vadd.f32 0.0, %v1341
        %1343 = vmatmul.bf16.gmra.mxu0 %v1269
        %v1344 = vpop.f32.mrf.mxu0
        %v1345 = vadd.f32 0.0, %v1344
        %v1346 = vpop.f32.mrf.mxu0
        %v1347 = vadd.f32 0.0, %v1346
        %1348 = vmatmul.bf16.gmra.mxu0 %v1272
        %v1349 = vpop.f32.mrf.mxu0
        %v1350 = vadd.f32 0.0, %v1349
        %v1351 = vpop.f32.mrf.mxu0
        %v1352 = vadd.f32 0.0, %v1351
        %1353 = vmatmul.bf16.gmra.mxu0 %v1275
        %v1354 = vpop.f32.mrf.mxu0
        %v1355 = vadd.f32 0.0, %v1354
        %v1356 = vpop.f32.mrf.mxu0
        %v1357 = vadd.f32 0.0, %v1356
        %1358 = vmatmul.bf16.gmra.mxu0 %v1278
        %v1359 = vpop.f32.mrf.mxu0
        %v1360 = vadd.f32 0.0, %v1359
        %v1361 = vpop.f32.mrf.mxu0
        %v1362 = vadd.f32 0.0, %v1361
        %1363 = vmatmul.bf16.gmra.mxu0 %v1281
        %v1364 = vpop.f32.mrf.mxu0
        %v1365 = vadd.f32 0.0, %v1364
        %v1366 = vpop.f32.mrf.mxu0
        %v1367 = vadd.f32 0.0, %v1366
        %1368 = vmatmul.bf16.gmra.mxu0 %v1284
        %v1369 = vpop.f32.mrf.mxu0
        %v1370 = vadd.f32 0.0, %v1369
        %v1371 = vpop.f32.mrf.mxu0
        %v1372 = vadd.f32 0.0, %v1371
        %1373 = vmatmul.bf16.gmra.mxu0 %v1287
        %v1374 = vpop.f32.mrf.mxu0
        %v1375 = vadd.f32 0.0, %v1374
        %v1376 = vpop.f32.mrf.mxu0
        %v1377 = vadd.f32 0.0, %v1376
        %1378 = vmatmul.bf16.gmra.mxu0 %v1290
        %v1379 = vpop.f32.mrf.mxu0
        %v1380 = vadd.f32 0.0, %v1379
        %v1381 = vpop.f32.mrf.mxu0
        %v1382 = vadd.f32 0.0, %v1381
        %1383 = vmatmul.bf16.gmra.mxu0 %v1293
        %v1384 = vpop.f32.mrf.mxu0
        %v1385 = vadd.f32 0.0, %v1384
        %v1386 = vpop.f32.mrf.mxu0
        %v1387 = vadd.f32 0.0, %v1386
        %1388 = vmatmul.bf16.gmra.mxu0 %v1296
        %v1389 = vpop.f32.mrf.mxu0
        %v1390 = vadd.f32 0.0, %v1389
        %v1391 = vpop.f32.mrf.mxu0
        %v1392 = vadd.f32 0.0, %v1391
        %1393 = vmatmul.bf16.gmra.mxu0 %v1299
        %v1394 = vpop.f32.mrf.mxu0
        %v1395 = vadd.f32 0.0, %v1394
        %v1396 = vpop.f32.mrf.mxu0
        %v1397 = vadd.f32 0.0, %v1396
        %1398 = vmatmul.bf16.gmra.mxu0 %v1302
        %v1399 = vpop.f32.mrf.mxu0
        %v1400 = vadd.f32 0.0, %v1399
        %v1401 = vpop.f32.mrf.mxu0
        %v1402 = vadd.f32 0.0, %v1401
        %1403 = vmatmul.bf16.gmra.mxu0 %v1305
        %v1404 = vpop.f32.mrf.mxu0
        %v1405 = vadd.f32 0.0, %v1404
        %v1406 = vpop.f32.mrf.mxu0
        %v1407 = vadd.f32 0.0, %v1406
        %1408 = vdwg.mxu0
        %v1409 = vadd.f32 %v1129, %v1320
        %v1410 = vadd.f32 %v1130, %v1322
        %v1411 = vadd.f32 %v1131, %v1325
        %v1412 = vadd.f32 %v1132, %v1327
        %v1413 = vadd.f32 %v1133, %v1330
        %v1414 = vadd.f32 %v1134, %v1332
        %v1415 = vadd.f32 %v1135, %v1335
        %v1416 = vadd.f32 %v1136, %v1337
        %v1417 = vadd.f32 %v1137, %v1340
        %v1418 = vadd.f32 %v1138, %v1342
        %v1419 = vadd.f32 %v1139, %v1345
        %v1420 = vadd.f32 %v1140, %v1347
        %v1421 = vadd.f32 %v1141, %v1350
        %v1422 = vadd.f32 %v1142, %v1352
        %v1423 = vadd.f32 %v1143, %v1355
        %v1424 = vadd.f32 %v1144, %v1357
        %v1425 = vadd.f32 %v1145, %v1360
        %v1426 = vadd.f32 %v1146, %v1362
        %v1427 = vadd.f32 %v1147, %v1365
        %v1428 = vadd.f32 %v1148, %v1367
        %v1429 = vadd.f32 %v1149, %v1370
        %v1430 = vadd.f32 %v1150, %v1372
        %v1431 = vadd.f32 %v1151, %v1375
        %v1432 = vadd.f32 %v1152, %v1377
        %v1433 = vadd.f32 %v1153, %v1380
        %v1434 = vadd.f32 %v1154, %v1382
        %v1435 = vadd.f32 %v1155, %v1385
        %v1436 = vadd.f32 %v1156, %v1387
        %v1437 = vadd.f32 %v1157, %v1390
        %v1438 = vadd.f32 %v1158, %v1392
        %v1439 = vadd.f32 %v1159, %v1395
        %v1440 = vadd.f32 %v1160, %v1397
        %v1441 = vadd.f32 %v1161, %v1400
        %v1442 = vadd.f32 %v1162, %v1402
        %v1443 = vadd.f32 %v1163, %v1405
        %v1444 = vadd.f32 %v1164, %v1407
        %s1445 = scalar_lea.vmem %s1, 10
        %v1446 = vld [vmem:[%s1445] sm:$0x3]
        %vm1447 = vcmask 1045504
        %v1448 = vrot.slane %v311, 2
        %v1449 = vrot.slane %v312, 2
        %v1450 = vsel %vm1447, %v1448, %v1449
        %v1451 = vrot.slane %v313, 2
        %v1452 = vsel %vm1447, %v1449, %v1451
        %v1453 = vrot.slane %v314, 2
        %v1454 = vsel %vm1447, %v1451, %v1453
        %v1455 = vrot.slane %v315, 2
        %v1456 = vsel %vm1447, %v1453, %v1455
        %v1457 = vrot.slane %v316, 2
        %v1458 = vsel %vm1447, %v1455, %v1457
        %v1459 = vrot.slane %v317, 2
        %v1460 = vsel %vm1447, %v1457, %v1459
        %v1461 = vrot.slane %v318, 2
        %v1462 = vsel %vm1447, %v1459, %v1461
        %v1463 = vrot.slane %v319, 2
        %v1464 = vsel %vm1447, %v1461, %v1463
        %v1465 = vrot.slane %v320, 2
        %v1466 = vsel %vm1447, %v1463, %v1465
        %v1467 = vrot.slane %v321, 2
        %v1468 = vsel %vm1447, %v1465, %v1467
        %v1469 = vrot.slane %v322, 2
        %v1470 = vsel %vm1447, %v1467, %v1469
        %v1471 = vrot.slane %v323, 2
        %v1472 = vsel %vm1447, %v1469, %v1471
        %v1473 = vrot.slane %v324, 2
        %v1474 = vsel %vm1447, %v1471, %v1473
        %v1475 = vrot.slane %v325, 2
        %v1476 = vsel %vm1447, %v1473, %v1475
        %v1477 = vrot.slane %v326, 2
        %v1478 = vsel %vm1447, %v1475, %v1477
        %v1479 = vrot.slane %v327, 2
        %v1480 = vsel %vm1447, %v1477, %v1479
        %v1481 = vrot.slane %v1015, 2
        %v1482 = vsel %vm1447, %v1479, %v1481
        %v1483 = vrot.slane %v1016, 2
        %v1484 = vsel %vm1447, %v1481, %v1483
        %v1486 = vsel %vm478, %v1450, 0
        %v1489 = vsel %vm478, %v1452, 0
        %v1492 = vsel %vm478, %v1454, 0
        %v1495 = vsel %vm478, %v1456, 0
        %v1498 = vsel %vm478, %v1458, 0
        %v1501 = vsel %vm478, %v1460, 0
        %v1504 = vsel %vm478, %v1462, 0
        %v1507 = vsel %vm478, %v1464, 0
        %v1510 = vsel %vm478, %v1466, 0
        %v1513 = vsel %vm478, %v1468, 0
        %v1516 = vsel %vm478, %v1470, 0
        %v1519 = vsel %vm478, %v1472, 0
        %v1522 = vsel %vm478, %v1474, 0
        %v1525 = vsel %vm478, %v1476, 0
        %v1528 = vsel %vm478, %v1478, 0
        %v1531 = vsel %vm478, %v1480, 0
        %v1534 = vsel %vm478, %v1482, 0
        %v1537 = vsel %vm478, %v1484, 0
        %v1540 = vand.u32 %v1446, %v536
        %1542 = vmatpush.bf16.msra.mxu0 0
        %1543 = vmatpush.bf16.msra.mxu0 0
        %1544 = vmatpush.bf16.msra.mxu0 0
        %1545 = vmatpush.bf16.msra.mxu0 0
        %1546 = vmatpush.bf16.msra.mxu0 0
        %1547 = vmatpush.bf16.msra.mxu0 0
        %1548 = vmatpush.bf16.msra.mxu0 0
        %1549 = vmatpush.bf16.msra.mxu0 %v1540
        %1550 = vmatmul.bf16.gmra.mxu0 %v1486
        %v1551 = vpop.f32.mrf.mxu0
        %v1552 = vadd.f32 0.0, %v1551
        %v1553 = vpop.f32.mrf.mxu0
        %v1554 = vadd.f32 0.0, %v1553
        %1555 = vmatmul.bf16.gmra.mxu0 %v1489
        %v1556 = vpop.f32.mrf.mxu0
        %v1557 = vadd.f32 0.0, %v1556
        %v1558 = vpop.f32.mrf.mxu0
        %v1559 = vadd.f32 0.0, %v1558
        %1560 = vmatmul.bf16.gmra.mxu0 %v1492
        %v1561 = vpop.f32.mrf.mxu0
        %v1562 = vadd.f32 0.0, %v1561
        %v1563 = vpop.f32.mrf.mxu0
        %v1564 = vadd.f32 0.0, %v1563
        %1565 = vmatmul.bf16.gmra.mxu0 %v1495
        %v1566 = vpop.f32.mrf.mxu0
        %v1567 = vadd.f32 0.0, %v1566
        %v1568 = vpop.f32.mrf.mxu0
        %v1569 = vadd.f32 0.0, %v1568
        %1570 = vmatmul.bf16.gmra.mxu0 %v1498
        %v1571 = vpop.f32.mrf.mxu0
        %v1572 = vadd.f32 0.0, %v1571
        %v1573 = vpop.f32.mrf.mxu0
        %v1574 = vadd.f32 0.0, %v1573
        %1575 = vmatmul.bf16.gmra.mxu0 %v1501
        %v1576 = vpop.f32.mrf.mxu0
        %v1577 = vadd.f32 0.0, %v1576
        %v1578 = vpop.f32.mrf.mxu0
        %v1579 = vadd.f32 0.0, %v1578
        %1580 = vmatmul.bf16.gmra.mxu0 %v1504
        %v1581 = vpop.f32.mrf.mxu0
        %v1582 = vadd.f32 0.0, %v1581
        %v1583 = vpop.f32.mrf.mxu0
        %v1584 = vadd.f32 0.0, %v1583
        %1585 = vmatmul.bf16.gmra.mxu0 %v1507
        %v1586 = vpop.f32.mrf.mxu0
        %v1587 = vadd.f32 0.0, %v1586
        %v1588 = vpop.f32.mrf.mxu0
        %v1589 = vadd.f32 0.0, %v1588
        %1590 = vmatmul.bf16.gmra.mxu0 %v1510
        %v1591 = vpop.f32.mrf.mxu0
        %v1592 = vadd.f32 0.0, %v1591
        %v1593 = vpop.f32.mrf.mxu0
        %v1594 = vadd.f32 0.0, %v1593
        %1595 = vmatmul.bf16.gmra.mxu0 %v1513
        %v1596 = vpop.f32.mrf.mxu0
        %v1597 = vadd.f32 0.0, %v1596
        %v1598 = vpop.f32.mrf.mxu0
        %v1599 = vadd.f32 0.0, %v1598
        %1600 = vmatmul.bf16.gmra.mxu0 %v1516
        %v1601 = vpop.f32.mrf.mxu0
        %v1602 = vadd.f32 0.0, %v1601
        %v1603 = vpop.f32.mrf.mxu0
        %v1604 = vadd.f32 0.0, %v1603
        %1605 = vmatmul.bf16.gmra.mxu0 %v1519
        %v1606 = vpop.f32.mrf.mxu0
        %v1607 = vadd.f32 0.0, %v1606
        %v1608 = vpop.f32.mrf.mxu0
        %v1609 = vadd.f32 0.0, %v1608
        %1610 = vmatmul.bf16.gmra.mxu0 %v1522
        %v1611 = vpop.f32.mrf.mxu0
        %v1612 = vadd.f32 0.0, %v1611
        %v1613 = vpop.f32.mrf.mxu0
        %v1614 = vadd.f32 0.0, %v1613
        %1615 = vmatmul.bf16.gmra.mxu0 %v1525
        %v1616 = vpop.f32.mrf.mxu0
        %v1617 = vadd.f32 0.0, %v1616
        %v1618 = vpop.f32.mrf.mxu0
        %v1619 = vadd.f32 0.0, %v1618
        %1620 = vmatmul.bf16.gmra.mxu0 %v1528
        %v1621 = vpop.f32.mrf.mxu0
        %v1622 = vadd.f32 0.0, %v1621
        %v1623 = vpop.f32.mrf.mxu0
        %v1624 = vadd.f32 0.0, %v1623
        %1625 = vmatmul.bf16.gmra.mxu0 %v1531
        %v1626 = vpop.f32.mrf.mxu0
        %v1627 = vadd.f32 0.0, %v1626
        %v1628 = vpop.f32.mrf.mxu0
        %v1629 = vadd.f32 0.0, %v1628
        %1630 = vmatmul.bf16.gmra.mxu0 %v1534
        %v1631 = vpop.f32.mrf.mxu0
        %v1632 = vadd.f32 0.0, %v1631
        %v1633 = vpop.f32.mrf.mxu0
        %v1634 = vadd.f32 0.0, %v1633
        %1635 = vmatmul.bf16.gmra.mxu0 %v1537
        %v1636 = vpop.f32.mrf.mxu0
        %v1637 = vadd.f32 0.0, %v1636
        %v1638 = vpop.f32.mrf.mxu0
        %v1639 = vadd.f32 0.0, %v1638
        %1640 = vdwg.mxu0
        %v1641 = vadd.f32 %v1409, %v1552
        %v1642 = vadd.f32 %v1410, %v1554
        %v1643 = vadd.f32 %v1411, %v1557
        %v1644 = vadd.f32 %v1412, %v1559
        %v1645 = vadd.f32 %v1413, %v1562
        %v1646 = vadd.f32 %v1414, %v1564
        %v1647 = vadd.f32 %v1415, %v1567
        %v1648 = vadd.f32 %v1416, %v1569
        %v1649 = vadd.f32 %v1417, %v1572
        %v1650 = vadd.f32 %v1418, %v1574
        %v1651 = vadd.f32 %v1419, %v1577
        %v1652 = vadd.f32 %v1420, %v1579
        %v1653 = vadd.f32 %v1421, %v1582
        %v1654 = vadd.f32 %v1422, %v1584
        %v1655 = vadd.f32 %v1423, %v1587
        %v1656 = vadd.f32 %v1424, %v1589
        %v1657 = vadd.f32 %v1425, %v1592
        %v1658 = vadd.f32 %v1426, %v1594
        %v1659 = vadd.f32 %v1427, %v1597
        %v1660 = vadd.f32 %v1428, %v1599
        %v1661 = vadd.f32 %v1429, %v1602
        %v1662 = vadd.f32 %v1430, %v1604
        %v1663 = vadd.f32 %v1431, %v1607
        %v1664 = vadd.f32 %v1432, %v1609
        %v1665 = vadd.f32 %v1433, %v1612
        %v1666 = vadd.f32 %v1434, %v1614
        %v1667 = vadd.f32 %v1435, %v1617
        %v1668 = vadd.f32 %v1436, %v1619
        %v1669 = vadd.f32 %v1437, %v1622
        %v1670 = vadd.f32 %v1438, %v1624
        %v1671 = vadd.f32 %v1439, %v1627
        %v1672 = vadd.f32 %v1440, %v1629
        %v1673 = vadd.f32 %v1441, %v1632
        %v1674 = vadd.f32 %v1442, %v1634
        %v1675 = vadd.f32 %v1443, %v1637
        %v1676 = vadd.f32 %v1444, %v1639
        %s1677 = scalar_lea.vmem %s1, 12
        %v1678 = vld [vmem:[%s1677] sm:$0x3]
        %v1681 = vunpack.c.l.b16 %v231
        %v1682 = vunpack.c.l.b16 %v232
        %v1683 = vpack.c.b16 %v1681, %v1014
        %v1684 = vpack.c.b16 %v1682, %v1682
        %v1685 = vrot.slane %v1683, 2
        %v1686 = vsel %vm1447, %v1481, %v1685
        %v1687 = vrot.slane %v1684, 2
        %v1688 = vsel %vm1447, %v1685, %v1687
        %v1690 = vsel %vm478, %v1686, 0
        %v1693 = vsel %vm478, %v1688, 0
        %v1696 = vand.u32 %v1678, %v536
        %1698 = vmatpush.bf16.msra.mxu0 0
        %1699 = vmatpush.bf16.msra.mxu0 0
        %1700 = vmatpush.bf16.msra.mxu0 0
        %1701 = vmatpush.bf16.msra.mxu0 0
        %1702 = vmatpush.bf16.msra.mxu0 0
        %1703 = vmatpush.bf16.msra.mxu0 0
        %1704 = vmatpush.bf16.msra.mxu0 0
        %1705 = vmatpush.bf16.msra.mxu0 %v1696
        %1706 = vmatmul.bf16.gmra.mxu0 %v1489
        %v1707 = vpop.f32.mrf.mxu0
        %v1708 = vadd.f32 0.0, %v1707
        %v1709 = vpop.f32.mrf.mxu0
        %v1710 = vadd.f32 0.0, %v1709
        %1711 = vmatmul.bf16.gmra.mxu0 %v1492
        %v1712 = vpop.f32.mrf.mxu0
        %v1713 = vadd.f32 0.0, %v1712
        %v1714 = vpop.f32.mrf.mxu0
        %v1715 = vadd.f32 0.0, %v1714
        %1716 = vmatmul.bf16.gmra.mxu0 %v1495
        %v1717 = vpop.f32.mrf.mxu0
        %v1718 = vadd.f32 0.0, %v1717
        %v1719 = vpop.f32.mrf.mxu0
        %v1720 = vadd.f32 0.0, %v1719
        %1721 = vmatmul.bf16.gmra.mxu0 %v1498
        %v1722 = vpop.f32.mrf.mxu0
        %v1723 = vadd.f32 0.0, %v1722
        %v1724 = vpop.f32.mrf.mxu0
        %v1725 = vadd.f32 0.0, %v1724
        %1726 = vmatmul.bf16.gmra.mxu0 %v1501
        %v1727 = vpop.f32.mrf.mxu0
        %v1728 = vadd.f32 0.0, %v1727
        %v1729 = vpop.f32.mrf.mxu0
        %v1730 = vadd.f32 0.0, %v1729
        %1731 = vmatmul.bf16.gmra.mxu0 %v1504
        %v1732 = vpop.f32.mrf.mxu0
        %v1733 = vadd.f32 0.0, %v1732
        %v1734 = vpop.f32.mrf.mxu0
        %v1735 = vadd.f32 0.0, %v1734
        %1736 = vmatmul.bf16.gmra.mxu0 %v1507
        %v1737 = vpop.f32.mrf.mxu0
        %v1738 = vadd.f32 0.0, %v1737
        %v1739 = vpop.f32.mrf.mxu0
        %v1740 = vadd.f32 0.0, %v1739
        %1741 = vmatmul.bf16.gmra.mxu0 %v1510
        %v1742 = vpop.f32.mrf.mxu0
        %v1743 = vadd.f32 0.0, %v1742
        %v1744 = vpop.f32.mrf.mxu0
        %v1745 = vadd.f32 0.0, %v1744
        %1746 = vmatmul.bf16.gmra.mxu0 %v1513
        %v1747 = vpop.f32.mrf.mxu0
        %v1748 = vadd.f32 0.0, %v1747
        %v1749 = vpop.f32.mrf.mxu0
        %v1750 = vadd.f32 0.0, %v1749
        %1751 = vmatmul.bf16.gmra.mxu0 %v1516
        %v1752 = vpop.f32.mrf.mxu0
        %v1753 = vadd.f32 0.0, %v1752
        %v1754 = vpop.f32.mrf.mxu0
        %v1755 = vadd.f32 0.0, %v1754
        %1756 = vmatmul.bf16.gmra.mxu0 %v1519
        %v1757 = vpop.f32.mrf.mxu0
        %v1758 = vadd.f32 0.0, %v1757
        %v1759 = vpop.f32.mrf.mxu0
        %v1760 = vadd.f32 0.0, %v1759
        %1761 = vmatmul.bf16.gmra.mxu0 %v1522
        %v1762 = vpop.f32.mrf.mxu0
        %v1763 = vadd.f32 0.0, %v1762
        %v1764 = vpop.f32.mrf.mxu0
        %v1765 = vadd.f32 0.0, %v1764
        %1766 = vmatmul.bf16.gmra.mxu0 %v1525
        %v1767 = vpop.f32.mrf.mxu0
        %v1768 = vadd.f32 0.0, %v1767
        %v1769 = vpop.f32.mrf.mxu0
        %v1770 = vadd.f32 0.0, %v1769
        %1771 = vmatmul.bf16.gmra.mxu0 %v1528
        %v1772 = vpop.f32.mrf.mxu0
        %v1773 = vadd.f32 0.0, %v1772
        %v1774 = vpop.f32.mrf.mxu0
        %v1775 = vadd.f32 0.0, %v1774
        %1776 = vmatmul.bf16.gmra.mxu0 %v1531
        %v1777 = vpop.f32.mrf.mxu0
        %v1778 = vadd.f32 0.0, %v1777
        %v1779 = vpop.f32.mrf.mxu0
        %v1780 = vadd.f32 0.0, %v1779
        %1781 = vmatmul.bf16.gmra.mxu0 %v1534
        %v1782 = vpop.f32.mrf.mxu0
        %v1783 = vadd.f32 0.0, %v1782
        %v1784 = vpop.f32.mrf.mxu0
        %v1785 = vadd.f32 0.0, %v1784
        %1786 = vmatmul.bf16.gmra.mxu0 %v1690
        %v1787 = vpop.f32.mrf.mxu0
        %v1788 = vadd.f32 0.0, %v1787
        %v1789 = vpop.f32.mrf.mxu0
        %v1790 = vadd.f32 0.0, %v1789
        %1791 = vmatmul.bf16.gmra.mxu0 %v1693
        %v1792 = vpop.f32.mrf.mxu0
        %v1793 = vadd.f32 0.0, %v1792
        %v1794 = vpop.f32.mrf.mxu0
        %v1795 = vadd.f32 0.0, %v1794
        %1796 = vdwg.mxu0
        %v1797 = vadd.f32 %v1641, %v1708
        %v1798 = vadd.f32 %v1642, %v1710
        %v1799 = vadd.f32 %v1643, %v1713
        %v1800 = vadd.f32 %v1644, %v1715
        %v1801 = vadd.f32 %v1645, %v1718
        %v1802 = vadd.f32 %v1646, %v1720
        %v1803 = vadd.f32 %v1647, %v1723
        %v1804 = vadd.f32 %v1648, %v1725
        %v1805 = vadd.f32 %v1649, %v1728
        %v1806 = vadd.f32 %v1650, %v1730
        %v1807 = vadd.f32 %v1651, %v1733
        %v1808 = vadd.f32 %v1652, %v1735
        %v1809 = vadd.f32 %v1653, %v1738
        %v1810 = vadd.f32 %v1654, %v1740
        %v1811 = vadd.f32 %v1655, %v1743
        %v1812 = vadd.f32 %v1656, %v1745
        %v1813 = vadd.f32 %v1657, %v1748
        %v1814 = vadd.f32 %v1658, %v1750
        %v1815 = vadd.f32 %v1659, %v1753
        %v1816 = vadd.f32 %v1660, %v1755
        %v1817 = vadd.f32 %v1661, %v1758
        %v1818 = vadd.f32 %v1662, %v1760
        %v1819 = vadd.f32 %v1663, %v1763
        %v1820 = vadd.f32 %v1664, %v1765
        %v1821 = vadd.f32 %v1665, %v1768
        %v1822 = vadd.f32 %v1666, %v1770
        %v1823 = vadd.f32 %v1667, %v1773
        %v1824 = vadd.f32 %v1668, %v1775
        %v1825 = vadd.f32 %v1669, %v1778
        %v1826 = vadd.f32 %v1670, %v1780
        %v1827 = vadd.f32 %v1671, %v1783
        %v1828 = vadd.f32 %v1672, %v1785
        %v1829 = vadd.f32 %v1673, %v1788
        %v1830 = vadd.f32 %v1674, %v1790
        %v1831 = vadd.f32 %v1675, %v1793
        %v1832 = vadd.f32 %v1676, %v1795
        %s1833 = scalar_lea.vmem %s1, 14
        %v1834 = vld [vmem:[%s1833] sm:$0x3]
        %vm1835 = vsmask.f32 5376
        %v1836 = vrot.slane %v350, 2
        %v1837 = vrot.slane %v346, 3
        %v1838 = vor.u32 %v1836, %v1837
        %v1839 = vrot.slane %v358, 2
        %v1840 = vrot.slane %v354, 3
        %v1841 = vor.u32 %v1839, %v1840
        %v1842 = vsel %vm1835, %v1838, %v1841
        %v1843 = vrot.slane %v366, 2
        %v1844 = vrot.slane %v362, 3
        %v1845 = vor.u32 %v1843, %v1844
        %v1846 = vsel %vm1835, %v1841, %v1845
        %v1847 = vrot.slane %v374, 2
        %v1848 = vrot.slane %v370, 3
        %v1849 = vor.u32 %v1847, %v1848
        %v1850 = vsel %vm1835, %v1845, %v1849
        %v1851 = vrot.slane %v382, 2
        %v1852 = vrot.slane %v378, 3
        %v1853 = vor.u32 %v1851, %v1852
        %v1854 = vsel %vm1835, %v1849, %v1853
        %v1855 = vrot.slane %v390, 2
        %v1856 = vrot.slane %v386, 3
        %v1857 = vor.u32 %v1855, %v1856
        %v1858 = vsel %vm1835, %v1853, %v1857
        %v1859 = vrot.slane %v398, 2
        %v1860 = vrot.slane %v394, 3
        %v1861 = vor.u32 %v1859, %v1860
        %v1862 = vsel %vm1835, %v1857, %v1861
        %v1863 = vrot.slane %v406, 2
        %v1864 = vrot.slane %v402, 3
        %v1865 = vor.u32 %v1863, %v1864
        %v1866 = vsel %vm1835, %v1861, %v1865
        %v1867 = vrot.slane %v414, 2
        %v1868 = vrot.slane %v410, 3
        %v1869 = vor.u32 %v1867, %v1868
        %v1870 = vsel %vm1835, %v1865, %v1869
        %v1871 = vrot.slane %v422, 2
        %v1872 = vrot.slane %v418, 3
        %v1873 = vor.u32 %v1871, %v1872
        %v1874 = vsel %vm1835, %v1869, %v1873
        %v1875 = vrot.slane %v430, 2
        %v1876 = vrot.slane %v426, 3
        %v1877 = vor.u32 %v1875, %v1876
        %v1878 = vsel %vm1835, %v1873, %v1877
        %v1879 = vrot.slane %v438, 2
        %v1880 = vrot.slane %v434, 3
        %v1881 = vor.u32 %v1879, %v1880
        %v1882 = vsel %vm1835, %v1877, %v1881
        %v1883 = vrot.slane %v446, 2
        %v1884 = vrot.slane %v442, 3
        %v1885 = vor.u32 %v1883, %v1884
        %v1886 = vsel %vm1835, %v1881, %v1885
        %v1887 = vrot.slane %v454, 2
        %v1888 = vrot.slane %v450, 3
        %v1889 = vor.u32 %v1887, %v1888
        %v1890 = vsel %vm1835, %v1885, %v1889
        %v1891 = vrot.slane %v462, 2
        %v1892 = vrot.slane %v458, 3
        %v1893 = vor.u32 %v1891, %v1892
        %v1894 = vsel %vm1835, %v1889, %v1893
        %v1895 = vrot.slane %v470, 2
        %v1896 = vrot.slane %v466, 3
        %v1897 = vor.u32 %v1895, %v1896
        %v1898 = vsel %vm1835, %v1893, %v1897
        %v1899 = vrot.slane %v1236, 2
        %v1900 = vrot.slane %v1239, 3
        %v1901 = vor.u32 %v1899, %v1900
        %v1902 = vsel %vm1835, %v1897, %v1901
        %v1904 = vshrl.u32 %v1683, 16
        %v1906 = vrot.slane %v1904, 2
        %v1907 = vshll.u32 %v1683, 16
        %v1909 = vrot.slane %v1907, 3
        %v1910 = vor.u32 %v1906, %v1909
        %v1911 = vsel %vm1835, %v1901, %v1910
        %v1913 = vshrl.u32 %v1684, 16
        %v1915 = vrot.slane %v1913, 2
        %v1916 = vshll.u32 %v1684, 16
        %v1918 = vrot.slane %v1916, 3
        %v1919 = vor.u32 %v1915, %v1918
        %v1920 = vsel %vm1835, %v1910, %v1919
        %v1922 = vsel %vm478, %v1842, 0
        %v1925 = vsel %vm478, %v1846, 0
        %v1928 = vsel %vm478, %v1850, 0
        %v1931 = vsel %vm478, %v1854, 0
        %v1934 = vsel %vm478, %v1858, 0
        %v1937 = vsel %vm478, %v1862, 0
        %v1940 = vsel %vm478, %v1866, 0
        %v1943 = vsel %vm478, %v1870, 0
        %v1946 = vsel %vm478, %v1874, 0
        %v1949 = vsel %vm478, %v1878, 0
        %v1952 = vsel %vm478, %v1882, 0
        %v1955 = vsel %vm478, %v1886, 0
        %v1958 = vsel %vm478, %v1890, 0
        %v1961 = vsel %vm478, %v1894, 0
        %v1964 = vsel %vm478, %v1898, 0
        %v1967 = vsel %vm478, %v1902, 0
        %v1970 = vsel %vm478, %v1911, 0
        %v1973 = vsel %vm478, %v1920, 0
        %v1976 = vand.u32 %v1834, %v536
        %1978 = vmatpush.bf16.msra.mxu0 0
        %1979 = vmatpush.bf16.msra.mxu0 0
        %1980 = vmatpush.bf16.msra.mxu0 0
        %1981 = vmatpush.bf16.msra.mxu0 0
        %1982 = vmatpush.bf16.msra.mxu0 0
        %1983 = vmatpush.bf16.msra.mxu0 0
        %1984 = vmatpush.bf16.msra.mxu0 0
        %1985 = vmatpush.bf16.msra.mxu0 %v1976
        %1986 = vmatmul.bf16.gmra.mxu0 %v1922
        %v1987 = vpop.f32.mrf.mxu0
        %v1988 = vadd.f32 0.0, %v1987
        %v1989 = vpop.f32.mrf.mxu0
        %v1990 = vadd.f32 0.0, %v1989
        %1991 = vmatmul.bf16.gmra.mxu0 %v1925
        %v1992 = vpop.f32.mrf.mxu0
        %v1993 = vadd.f32 0.0, %v1992
        %v1994 = vpop.f32.mrf.mxu0
        %v1995 = vadd.f32 0.0, %v1994
        %1996 = vmatmul.bf16.gmra.mxu0 %v1928
        %v1997 = vpop.f32.mrf.mxu0
        %v1998 = vadd.f32 0.0, %v1997
        %v1999 = vpop.f32.mrf.mxu0
        %v2000 = vadd.f32 0.0, %v1999
        %2001 = vmatmul.bf16.gmra.mxu0 %v1931
        %v2002 = vpop.f32.mrf.mxu0
        %v2003 = vadd.f32 0.0, %v2002
        %v2004 = vpop.f32.mrf.mxu0
        %v2005 = vadd.f32 0.0, %v2004
        %2006 = vmatmul.bf16.gmra.mxu0 %v1934
        %v2007 = vpop.f32.mrf.mxu0
        %v2008 = vadd.f32 0.0, %v2007
        %v2009 = vpop.f32.mrf.mxu0
        %v2010 = vadd.f32 0.0, %v2009
        %2011 = vmatmul.bf16.gmra.mxu0 %v1937
        %v2012 = vpop.f32.mrf.mxu0
        %v2013 = vadd.f32 0.0, %v2012
        %v2014 = vpop.f32.mrf.mxu0
        %v2015 = vadd.f32 0.0, %v2014
        %2016 = vmatmul.bf16.gmra.mxu0 %v1940
        %v2017 = vpop.f32.mrf.mxu0
        %v2018 = vadd.f32 0.0, %v2017
        %v2019 = vpop.f32.mrf.mxu0
        %v2020 = vadd.f32 0.0, %v2019
        %2021 = vmatmul.bf16.gmra.mxu0 %v1943
        %v2022 = vpop.f32.mrf.mxu0
        %v2023 = vadd.f32 0.0, %v2022
        %v2024 = vpop.f32.mrf.mxu0
        %v2025 = vadd.f32 0.0, %v2024
        %2026 = vmatmul.bf16.gmra.mxu0 %v1946
        %v2027 = vpop.f32.mrf.mxu0
        %v2028 = vadd.f32 0.0, %v2027
        %v2029 = vpop.f32.mrf.mxu0
        %v2030 = vadd.f32 0.0, %v2029
        %2031 = vmatmul.bf16.gmra.mxu0 %v1949
        %v2032 = vpop.f32.mrf.mxu0
        %v2033 = vadd.f32 0.0, %v2032
        %v2034 = vpop.f32.mrf.mxu0
        %v2035 = vadd.f32 0.0, %v2034
        %2036 = vmatmul.bf16.gmra.mxu0 %v1952
        %v2037 = vpop.f32.mrf.mxu0
        %v2038 = vadd.f32 0.0, %v2037
        %v2039 = vpop.f32.mrf.mxu0
        %v2040 = vadd.f32 0.0, %v2039
        %2041 = vmatmul.bf16.gmra.mxu0 %v1955
        %v2042 = vpop.f32.mrf.mxu0
        %v2043 = vadd.f32 0.0, %v2042
        %v2044 = vpop.f32.mrf.mxu0
        %v2045 = vadd.f32 0.0, %v2044
        %2046 = vmatmul.bf16.gmra.mxu0 %v1958
        %v2047 = vpop.f32.mrf.mxu0
        %v2048 = vadd.f32 0.0, %v2047
        %v2049 = vpop.f32.mrf.mxu0
        %v2050 = vadd.f32 0.0, %v2049
        %2051 = vmatmul.bf16.gmra.mxu0 %v1961
        %v2052 = vpop.f32.mrf.mxu0
        %v2053 = vadd.f32 0.0, %v2052
        %v2054 = vpop.f32.mrf.mxu0
        %v2055 = vadd.f32 0.0, %v2054
        %2056 = vmatmul.bf16.gmra.mxu0 %v1964
        %v2057 = vpop.f32.mrf.mxu0
        %v2058 = vadd.f32 0.0, %v2057
        %v2059 = vpop.f32.mrf.mxu0
        %v2060 = vadd.f32 0.0, %v2059
        %2061 = vmatmul.bf16.gmra.mxu0 %v1967
        %v2062 = vpop.f32.mrf.mxu0
        %v2063 = vadd.f32 0.0, %v2062
        %v2064 = vpop.f32.mrf.mxu0
        %v2065 = vadd.f32 0.0, %v2064
        %2066 = vmatmul.bf16.gmra.mxu0 %v1970
        %v2067 = vpop.f32.mrf.mxu0
        %v2068 = vadd.f32 0.0, %v2067
        %v2069 = vpop.f32.mrf.mxu0
        %v2070 = vadd.f32 0.0, %v2069
        %2071 = vmatmul.bf16.gmra.mxu0 %v1973
        %v2072 = vpop.f32.mrf.mxu0
        %v2073 = vadd.f32 0.0, %v2072
        %v2074 = vpop.f32.mrf.mxu0
        %v2075 = vadd.f32 0.0, %v2074
        %2076 = vdwg.mxu0
        %v2077 = vadd.f32 %v1797, %v1988
        %v2078 = vadd.f32 %v1798, %v1990
        %v2079 = vadd.f32 %v1799, %v1993
        %v2080 = vadd.f32 %v1800, %v1995
        %v2081 = vadd.f32 %v1801, %v1998
        %v2082 = vadd.f32 %v1802, %v2000
        %v2083 = vadd.f32 %v1803, %v2003
        %v2084 = vadd.f32 %v1804, %v2005
        %v2085 = vadd.f32 %v1805, %v2008
        %v2086 = vadd.f32 %v1806, %v2010
        %v2087 = vadd.f32 %v1807, %v2013
        %v2088 = vadd.f32 %v1808, %v2015
        %v2089 = vadd.f32 %v1809, %v2018
        %v2090 = vadd.f32 %v1810, %v2020
        %v2091 = vadd.f32 %v1811, %v2023
        %v2092 = vadd.f32 %v1812, %v2025
        %v2093 = vadd.f32 %v1813, %v2028
        %v2094 = vadd.f32 %v1814, %v2030
        %v2095 = vadd.f32 %v1815, %v2033
        %v2096 = vadd.f32 %v1816, %v2035
        %v2097 = vadd.f32 %v1817, %v2038
        %v2098 = vadd.f32 %v1818, %v2040
        %v2099 = vadd.f32 %v1819, %v2043
        %v2100 = vadd.f32 %v1820, %v2045
        %v2101 = vadd.f32 %v1821, %v2048
        %v2102 = vadd.f32 %v1822, %v2050
        %v2103 = vadd.f32 %v1823, %v2053
        %v2104 = vadd.f32 %v1824, %v2055
        %v2105 = vadd.f32 %v1825, %v2058
        %v2106 = vadd.f32 %v1826, %v2060
        %v2107 = vadd.f32 %v1827, %v2063
        %v2108 = vadd.f32 %v1828, %v2065
        %v2109 = vadd.f32 %v1829, %v2068
        %v2110 = vadd.f32 %v1830, %v2070
        %v2111 = vadd.f32 %v1831, %v2073
        %v2112 = vadd.f32 %v1832, %v2075
        %s2113 = scalar_lea.vmem %s1, 16
        %v2114 = vld [vmem:[%s2113] sm:$0x3]
        %vm2115 = vcmask 1044480
        %v2116 = vrot.slane %v312, 3
        %v2117 = vrot.slane %v313, 3
        %v2118 = vsel %vm2115, %v2116, %v2117
        %v2119 = vrot.slane %v314, 3
        %v2120 = vsel %vm2115, %v2117, %v2119
        %v2121 = vrot.slane %v315, 3
        %v2122 = vsel %vm2115, %v2119, %v2121
        %v2123 = vrot.slane %v316, 3
        %v2124 = vsel %vm2115, %v2121, %v2123
        %v2125 = vrot.slane %v317, 3
        %v2126 = vsel %vm2115, %v2123, %v2125
        %v2127 = vrot.slane %v318, 3
        %v2128 = vsel %vm2115, %v2125, %v2127
        %v2129 = vrot.slane %v319, 3
        %v2130 = vsel %vm2115, %v2127, %v2129
        %v2131 = vrot.slane %v320, 3
        %v2132 = vsel %vm2115, %v2129, %v2131
        %v2133 = vrot.slane %v321, 3
        %v2134 = vsel %vm2115, %v2131, %v2133
        %v2135 = vrot.slane %v322, 3
        %v2136 = vsel %vm2115, %v2133, %v2135
        %v2137 = vrot.slane %v323, 3
        %v2138 = vsel %vm2115, %v2135, %v2137
        %v2139 = vrot.slane %v324, 3
        %v2140 = vsel %vm2115, %v2137, %v2139
        %v2141 = vrot.slane %v325, 3
        %v2142 = vsel %vm2115, %v2139, %v2141
        %v2143 = vrot.slane %v326, 3
        %v2144 = vsel %vm2115, %v2141, %v2143
        %v2145 = vrot.slane %v327, 3
        %v2146 = vsel %vm2115, %v2143, %v2145
        %v2147 = vrot.slane %v1015, 3
        %v2148 = vsel %vm2115, %v2145, %v2147
        %v2149 = vrot.slane %v1683, 3
        %v2150 = vsel %vm2115, %v2147, %v2149
        %v2151 = vrot.slane %v1684, 3
        %v2152 = vsel %vm2115, %v2149, %v2151
        %v2154 = vsel %vm478, %v2118, 0
        %v2157 = vsel %vm478, %v2120, 0
        %v2160 = vsel %vm478, %v2122, 0
        %v2163 = vsel %vm478, %v2124, 0
        %v2166 = vsel %vm478, %v2126, 0
        %v2169 = vsel %vm478, %v2128, 0
        %v2172 = vsel %vm478, %v2130, 0
        %v2175 = vsel %vm478, %v2132, 0
        %v2178 = vsel %vm478, %v2134, 0
        %v2181 = vsel %vm478, %v2136, 0
        %v2184 = vsel %vm478, %v2138, 0
        %v2187 = vsel %vm478, %v2140, 0
        %v2190 = vsel %vm478, %v2142, 0
        %v2193 = vsel %vm478, %v2144, 0
        %v2196 = vsel %vm478, %v2146, 0
        %v2199 = vsel %vm478, %v2148, 0
        %v2202 = vsel %vm478, %v2150, 0
        %v2205 = vsel %vm478, %v2152, 0
        %v2208 = vand.u32 %v2114, %v536
        %2210 = vmatpush.bf16.msra.mxu0 0
        %2211 = vmatpush.bf16.msra.mxu0 0
        %2212 = vmatpush.bf16.msra.mxu0 0
        %2213 = vmatpush.bf16.msra.mxu0 0
        %2214 = vmatpush.bf16.msra.mxu0 0
        %2215 = vmatpush.bf16.msra.mxu0 0
        %2216 = vmatpush.bf16.msra.mxu0 0
        %2217 = vmatpush.bf16.msra.mxu0 %v2208
        %2218 = vmatmul.bf16.gmra.mxu0 %v2154
        %v2219 = vpop.f32.mrf.mxu0
        %v2220 = vadd.f32 0.0, %v2219
        %v2221 = vpop.f32.mrf.mxu0
        %v2222 = vadd.f32 0.0, %v2221
        %2223 = vmatmul.bf16.gmra.mxu0 %v2157
        %v2224 = vpop.f32.mrf.mxu0
        %v2225 = vadd.f32 0.0, %v2224
        %v2226 = vpop.f32.mrf.mxu0
        %v2227 = vadd.f32 0.0, %v2226
        %2228 = vmatmul.bf16.gmra.mxu0 %v2160
        %v2229 = vpop.f32.mrf.mxu0
        %v2230 = vadd.f32 0.0, %v2229
        %v2231 = vpop.f32.mrf.mxu0
        %v2232 = vadd.f32 0.0, %v2231
        %2233 = vmatmul.bf16.gmra.mxu0 %v2163
        %v2234 = vpop.f32.mrf.mxu0
        %v2235 = vadd.f32 0.0, %v2234
        %v2236 = vpop.f32.mrf.mxu0
        %v2237 = vadd.f32 0.0, %v2236
        %2238 = vmatmul.bf16.gmra.mxu0 %v2166
        %v2239 = vpop.f32.mrf.mxu0
        %v2240 = vadd.f32 0.0, %v2239
        %v2241 = vpop.f32.mrf.mxu0
        %v2242 = vadd.f32 0.0, %v2241
        %2243 = vmatmul.bf16.gmra.mxu0 %v2169
        %v2244 = vpop.f32.mrf.mxu0
        %v2245 = vadd.f32 0.0, %v2244
        %v2246 = vpop.f32.mrf.mxu0
        %v2247 = vadd.f32 0.0, %v2246
        %2248 = vmatmul.bf16.gmra.mxu0 %v2172
        %v2249 = vpop.f32.mrf.mxu0
        %v2250 = vadd.f32 0.0, %v2249
        %v2251 = vpop.f32.mrf.mxu0
        %v2252 = vadd.f32 0.0, %v2251
        %2253 = vmatmul.bf16.gmra.mxu0 %v2175
        %v2254 = vpop.f32.mrf.mxu0
        %v2255 = vadd.f32 0.0, %v2254
        %v2256 = vpop.f32.mrf.mxu0
        %v2257 = vadd.f32 0.0, %v2256
        %2258 = vmatmul.bf16.gmra.mxu0 %v2178
        %v2259 = vpop.f32.mrf.mxu0
        %v2260 = vadd.f32 0.0, %v2259
        %v2261 = vpop.f32.mrf.mxu0
        %v2262 = vadd.f32 0.0, %v2261
        %2263 = vmatmul.bf16.gmra.mxu0 %v2181
        %v2264 = vpop.f32.mrf.mxu0
        %v2265 = vadd.f32 0.0, %v2264
        %v2266 = vpop.f32.mrf.mxu0
        %v2267 = vadd.f32 0.0, %v2266
        %2268 = vmatmul.bf16.gmra.mxu0 %v2184
        %v2269 = vpop.f32.mrf.mxu0
        %v2270 = vadd.f32 0.0, %v2269
        %v2271 = vpop.f32.mrf.mxu0
        %v2272 = vadd.f32 0.0, %v2271
        %2273 = vmatmul.bf16.gmra.mxu0 %v2187
        %v2274 = vpop.f32.mrf.mxu0
        %v2275 = vadd.f32 0.0, %v2274
        %v2276 = vpop.f32.mrf.mxu0
        %v2277 = vadd.f32 0.0, %v2276
        %2278 = vmatmul.bf16.gmra.mxu0 %v2190
        %v2279 = vpop.f32.mrf.mxu0
        %v2280 = vadd.f32 0.0, %v2279
        %v2281 = vpop.f32.mrf.mxu0
        %v2282 = vadd.f32 0.0, %v2281
        %2283 = vmatmul.bf16.gmra.mxu0 %v2193
        %v2284 = vpop.f32.mrf.mxu0
        %v2285 = vadd.f32 0.0, %v2284
        %v2286 = vpop.f32.mrf.mxu0
        %v2287 = vadd.f32 0.0, %v2286
        %2288 = vmatmul.bf16.gmra.mxu0 %v2196
        %v2289 = vpop.f32.mrf.mxu0
        %v2290 = vadd.f32 0.0, %v2289
        %v2291 = vpop.f32.mrf.mxu0
        %v2292 = vadd.f32 0.0, %v2291
        %2293 = vmatmul.bf16.gmra.mxu0 %v2199
        %v2294 = vpop.f32.mrf.mxu0
        %v2295 = vadd.f32 0.0, %v2294
        %v2296 = vpop.f32.mrf.mxu0
        %v2297 = vadd.f32 0.0, %v2296
        %2298 = vmatmul.bf16.gmra.mxu0 %v2202
        %v2299 = vpop.f32.mrf.mxu0
        %v2300 = vadd.f32 0.0, %v2299
        %v2301 = vpop.f32.mrf.mxu0
        %v2302 = vadd.f32 0.0, %v2301
        %2303 = vmatmul.bf16.gmra.mxu0 %v2205
        %v2304 = vpop.f32.mrf.mxu0
        %v2305 = vadd.f32 0.0, %v2304
        %v2306 = vpop.f32.mrf.mxu0
        %v2307 = vadd.f32 0.0, %v2306
        %2308 = vdwg.mxu0
        %v2309 = vadd.f32 %v2077, %v2220
        %v2310 = vadd.f32 %v2078, %v2222
        %v2311 = vadd.f32 %v2079, %v2225
        %v2312 = vadd.f32 %v2080, %v2227
        %v2313 = vadd.f32 %v2081, %v2230
        %v2314 = vadd.f32 %v2082, %v2232
        %v2315 = vadd.f32 %v2083, %v2235
        %v2316 = vadd.f32 %v2084, %v2237
        %v2317 = vadd.f32 %v2085, %v2240
        %v2318 = vadd.f32 %v2086, %v2242
        %v2319 = vadd.f32 %v2087, %v2245
        %v2320 = vadd.f32 %v2088, %v2247
        %v2321 = vadd.f32 %v2089, %v2250
        %v2322 = vadd.f32 %v2090, %v2252
        %v2323 = vadd.f32 %v2091, %v2255
        %v2324 = vadd.f32 %v2092, %v2257
        %v2325 = vadd.f32 %v2093, %v2260
        %v2326 = vadd.f32 %v2094, %v2262
        %v2327 = vadd.f32 %v2095, %v2265
        %v2328 = vadd.f32 %v2096, %v2267
        %v2329 = vadd.f32 %v2097, %v2270
        %v2330 = vadd.f32 %v2098, %v2272
        %v2331 = vadd.f32 %v2099, %v2275
        %v2332 = vadd.f32 %v2100, %v2277
        %v2333 = vadd.f32 %v2101, %v2280
        %v2334 = vadd.f32 %v2102, %v2282
        %v2335 = vadd.f32 %v2103, %v2285
        %v2336 = vadd.f32 %v2104, %v2287
        %v2337 = vadd.f32 %v2105, %v2290
        %v2338 = vadd.f32 %v2106, %v2292
        %v2339 = vadd.f32 %v2107, %v2295
        %v2340 = vadd.f32 %v2108, %v2297
        %v2341 = vadd.f32 %v2109, %v2300
        %v2342 = vadd.f32 %v2110, %v2302
        %v2343 = vadd.f32 %v2111, %v2305
        %v2344 = vadd.f32 %v2112, %v2307
        %v2345 = vld [vmem:[%s2] sm:$0x1]
        %v2347 = vperm.slane %v2345, 0
        %v2349 = vadd.f32 %v2309, %v2347
        %v2350 = vadd.f32 %v2310, %v2347
        %v2351 = vadd.f32 %v2311, %v2347
        %v2352 = vadd.f32 %v2312, %v2347
        %v2353 = vadd.f32 %v2313, %v2347
        %v2354 = vadd.f32 %v2314, %v2347
        %v2355 = vadd.f32 %v2315, %v2347
        %v2356 = vadd.f32 %v2316, %v2347
        %v2357 = vadd.f32 %v2317, %v2347
        %v2358 = vadd.f32 %v2318, %v2347
        %v2359 = vadd.f32 %v2319, %v2347
        %v2360 = vadd.f32 %v2320, %v2347
        %v2361 = vadd.f32 %v2321, %v2347
        %v2362 = vadd.f32 %v2322, %v2347
        %v2363 = vadd.f32 %v2323, %v2347
        %v2364 = vadd.f32 %v2324, %v2347
        %v2365 = vadd.f32 %v2325, %v2347
        %v2366 = vadd.f32 %v2326, %v2347
        %v2367 = vadd.f32 %v2327, %v2347
        %v2368 = vadd.f32 %v2328, %v2347
        %v2369 = vadd.f32 %v2329, %v2347
        %v2370 = vadd.f32 %v2330, %v2347
        %v2371 = vadd.f32 %v2331, %v2347
        %v2372 = vadd.f32 %v2332, %v2347
        %v2373 = vadd.f32 %v2333, %v2347
        %v2374 = vadd.f32 %v2334, %v2347
        %v2375 = vadd.f32 %v2335, %v2347
        %v2376 = vadd.f32 %v2336, %v2347
        %v2377 = vadd.f32 %v2337, %v2347
        %v2378 = vadd.f32 %v2338, %v2347
        %v2379 = vadd.f32 %v2339, %v2347
        %v2380 = vadd.f32 %v2340, %v2347
        %v2381 = vadd.f32 %v2341, %v2347
        %v2382 = vadd.f32 %v2342, %v2347
        %v2383 = vadd.f32 %v2343, %v2347
        %v2384 = vadd.f32 %v2344, %v2347
        %v2385 = vmax.f32 %v2349, 0.0
        %v2386 = vmax.f32 %v2350, 0.0
        %v2387 = vmax.f32 %v2351, 0.0
        %v2388 = vmax.f32 %v2352, 0.0
        %v2389 = vmax.f32 %v2353, 0.0
        %v2390 = vmax.f32 %v2354, 0.0
        %v2391 = vmax.f32 %v2355, 0.0
        %v2392 = vmax.f32 %v2356, 0.0
        %v2393 = vmax.f32 %v2357, 0.0
        %v2394 = vmax.f32 %v2358, 0.0
        %v2395 = vmax.f32 %v2359, 0.0
        %v2396 = vmax.f32 %v2360, 0.0
        %v2397 = vmax.f32 %v2361, 0.0
        %v2398 = vmax.f32 %v2362, 0.0
        %v2399 = vmax.f32 %v2363, 0.0
        %v2400 = vmax.f32 %v2364, 0.0
        %v2401 = vmax.f32 %v2365, 0.0
        %v2402 = vmax.f32 %v2366, 0.0
        %v2403 = vmax.f32 %v2367, 0.0
        %v2404 = vmax.f32 %v2368, 0.0
        %v2405 = vmax.f32 %v2369, 0.0
        %v2406 = vmax.f32 %v2370, 0.0
        %v2407 = vmax.f32 %v2371, 0.0
        %v2408 = vmax.f32 %v2372, 0.0
        %v2409 = vmax.f32 %v2373, 0.0
        %v2410 = vmax.f32 %v2374, 0.0
        %v2411 = vmax.f32 %v2375, 0.0
        %v2412 = vmax.f32 %v2376, 0.0
        %v2413 = vmax.f32 %v2377, 0.0
        %v2414 = vmax.f32 %v2378, 0.0
        %v2415 = vmax.f32 %v2379, 0.0
        %v2416 = vmax.f32 %v2380, 0.0
        %v2417 = vmax.f32 %v2381, 0.0
        %v2418 = vmax.f32 %v2382, 0.0
        %v2419 = vmax.f32 %v2383, 0.0
        %v2420 = vmax.f32 %v2384, 0.0
        %v2421 = vld [vmem:[%s3] sm:$0xff]
        %v2422 = vld [vmem:[%s3 + $0x8] sm:$0xff]
        %v2423 = vld [vmem:[%s3 + $0x10] sm:$0xff]
        %v2424 = vld [vmem:[%s3 + $0x18] sm:$0xff]
        %v2425 = vld [vmem:[%s3 + $0x20] sm:$0xff]
        %v2426 = vld [vmem:[%s3 + $0x28] sm:$0xff]
        %v2427 = vld [vmem:[%s3 + $0x30] sm:$0xff]
        %v2428 = vld [vmem:[%s3 + $0x38] sm:$0xff]
        %v2429 = vld [vmem:[%s3 + $0x40] sm:$0xff]
        %v2430 = vld [vmem:[%s3 + $0x48] sm:$0xff]
        %v2431 = vld [vmem:[%s3 + $0x50] sm:$0xff]
        %v2432 = vld [vmem:[%s3 + $0x58] sm:$0xff]
        %v2433 = vld [vmem:[%s3 + $0x60] sm:$0xff]
        %v2434 = vld [vmem:[%s3 + $0x68] sm:$0xff]
        %v2435 = vld [vmem:[%s3 + $0x70] sm:$0xff]
        %v2436 = vld [vmem:[%s3 + $0x78] sm:$0xff]
        %v2437 = vld [vmem:[%s3 + $0x80] sm:$0xff]
        %v2438 = vld [vmem:[%s3 + $0x88] sm:$0xff]
        %v2439 = vld [vmem:[%s3 + $0x90] sm:$0xff]
        %v2440 = vld [vmem:[%s3 + $0x98] sm:$0xff]
        %v2441 = vld [vmem:[%s3 + $0xa0] sm:$0xff]
        %v2442 = vld [vmem:[%s3 + $0xa8] sm:$0xff]
        %v2443 = vld [vmem:[%s3 + $0xb0] sm:$0xff]
        %v2444 = vld [vmem:[%s3 + $0xb8] sm:$0xff]
        %v2445 = vld [vmem:[%s3 + $0xc0] sm:$0xff]
        %v2446 = vld [vmem:[%s3 + $0xc8] sm:$0xff]
        %v2447 = vld [vmem:[%s3 + $0xd0] sm:$0xff]
        %v2448 = vld [vmem:[%s3 + $0xd8] sm:$0xff]
        %v2449 = vld [vmem:[%s3 + $0xe0] sm:$0xff]
        %v2450 = vld [vmem:[%s3 + $0xe8] sm:$0xff]
        %v2451 = vld [vmem:[%s3 + $0xf0] sm:$0xff]
        %v2452 = vld [vmem:[%s3 + $0xf8] sm:$0xff]
        %v2453 = vld [vmem:[%s3 + $0x100] sm:$0xff]
        %v2454 = vld [vmem:[%s3 + $0x108] sm:$0xff]
        %v2455 = vld [vmem:[%s3 + $0x110] sm:$0xff]
        %v2456 = vld [vmem:[%s3 + $0x118] sm:$0xff]
        %2458 = vset.pattern.permute.xlu0 0
        %2459 = vperm.xlu0 %2458, %v2421
        %v2460 = vpop.permute.xlu0 %2459
        %2463 = vset.pattern.permute.xlu0 0
        %2464 = vperm.xlu0 %2463, %v2422
        %v2465 = vpop.permute.xlu0 %2464
        %2468 = vset.pattern.permute.xlu0 0
        %2469 = vperm.xlu0 %2468, %v2423
        %v2470 = vpop.permute.xlu0 %2469
        %2473 = vset.pattern.permute.xlu0 0
        %2474 = vperm.xlu0 %2473, %v2424
        %v2475 = vpop.permute.xlu0 %2474
        %2478 = vset.pattern.permute.xlu0 0
        %2479 = vperm.xlu0 %2478, %v2425
        %v2480 = vpop.permute.xlu0 %2479
        %2483 = vset.pattern.permute.xlu0 0
        %2484 = vperm.xlu0 %2483, %v2426
        %v2485 = vpop.permute.xlu0 %2484
        %2488 = vset.pattern.permute.xlu0 0
        %2489 = vperm.xlu0 %2488, %v2427
        %v2490 = vpop.permute.xlu0 %2489
        %2493 = vset.pattern.permute.xlu0 0
        %2494 = vperm.xlu0 %2493, %v2428
        %v2495 = vpop.permute.xlu0 %2494
        %2498 = vset.pattern.permute.xlu0 0
        %2499 = vperm.xlu0 %2498, %v2429
        %v2500 = vpop.permute.xlu0 %2499
        %2503 = vset.pattern.permute.xlu0 0
        %2504 = vperm.xlu0 %2503, %v2430
        %v2505 = vpop.permute.xlu0 %2504
        %2508 = vset.pattern.permute.xlu0 0
        %2509 = vperm.xlu0 %2508, %v2431
        %v2510 = vpop.permute.xlu0 %2509
        %2513 = vset.pattern.permute.xlu0 0
        %2514 = vperm.xlu0 %2513, %v2432
        %v2515 = vpop.permute.xlu0 %2514
        %2518 = vset.pattern.permute.xlu0 0
        %2519 = vperm.xlu0 %2518, %v2433
        %v2520 = vpop.permute.xlu0 %2519
        %2523 = vset.pattern.permute.xlu0 0
        %2524 = vperm.xlu0 %2523, %v2434
        %v2525 = vpop.permute.xlu0 %2524
        %2528 = vset.pattern.permute.xlu0 0
        %2529 = vperm.xlu0 %2528, %v2435
        %v2530 = vpop.permute.xlu0 %2529
        %2533 = vset.pattern.permute.xlu0 0
        %2534 = vperm.xlu0 %2533, %v2436
        %v2535 = vpop.permute.xlu0 %2534
        %2538 = vset.pattern.permute.xlu0 0
        %2539 = vperm.xlu0 %2538, %v2437
        %v2540 = vpop.permute.xlu0 %2539
        %2543 = vset.pattern.permute.xlu0 0
        %2544 = vperm.xlu0 %2543, %v2438
        %v2545 = vpop.permute.xlu0 %2544
        %2548 = vset.pattern.permute.xlu0 0
        %2549 = vperm.xlu0 %2548, %v2439
        %v2550 = vpop.permute.xlu0 %2549
        %2553 = vset.pattern.permute.xlu0 0
        %2554 = vperm.xlu0 %2553, %v2440
        %v2555 = vpop.permute.xlu0 %2554
        %2558 = vset.pattern.permute.xlu0 0
        %2559 = vperm.xlu0 %2558, %v2441
        %v2560 = vpop.permute.xlu0 %2559
        %2563 = vset.pattern.permute.xlu0 0
        %2564 = vperm.xlu0 %2563, %v2442
        %v2565 = vpop.permute.xlu0 %2564
        %2568 = vset.pattern.permute.xlu0 0
        %2569 = vperm.xlu0 %2568, %v2443
        %v2570 = vpop.permute.xlu0 %2569
        %2573 = vset.pattern.permute.xlu0 0
        %2574 = vperm.xlu0 %2573, %v2444
        %v2575 = vpop.permute.xlu0 %2574
        %2578 = vset.pattern.permute.xlu0 0
        %2579 = vperm.xlu0 %2578, %v2445
        %v2580 = vpop.permute.xlu0 %2579
        %2583 = vset.pattern.permute.xlu0 0
        %2584 = vperm.xlu0 %2583, %v2446
        %v2585 = vpop.permute.xlu0 %2584
        %2588 = vset.pattern.permute.xlu0 0
        %2589 = vperm.xlu0 %2588, %v2447
        %v2590 = vpop.permute.xlu0 %2589
        %2593 = vset.pattern.permute.xlu0 0
        %2594 = vperm.xlu0 %2593, %v2448
        %v2595 = vpop.permute.xlu0 %2594
        %2598 = vset.pattern.permute.xlu0 0
        %2599 = vperm.xlu0 %2598, %v2449
        %v2600 = vpop.permute.xlu0 %2599
        %2603 = vset.pattern.permute.xlu0 0
        %2604 = vperm.xlu0 %2603, %v2450
        %v2605 = vpop.permute.xlu0 %2604
        %2608 = vset.pattern.permute.xlu0 0
        %2609 = vperm.xlu0 %2608, %v2451
        %v2610 = vpop.permute.xlu0 %2609
        %2613 = vset.pattern.permute.xlu0 0
        %2614 = vperm.xlu0 %2613, %v2452
        %v2615 = vpop.permute.xlu0 %2614
        %2618 = vset.pattern.permute.xlu0 0
        %2619 = vperm.xlu0 %2618, %v2453
        %v2620 = vpop.permute.xlu0 %2619
        %2623 = vset.pattern.permute.xlu0 0
        %2624 = vperm.xlu0 %2623, %v2454
        %v2625 = vpop.permute.xlu0 %2624
        %2628 = vset.pattern.permute.xlu0 0
        %2629 = vperm.xlu0 %2628, %v2455
        %v2630 = vpop.permute.xlu0 %2629
        %2633 = vset.pattern.permute.xlu0 0
        %2634 = vperm.xlu0 %2633, %v2456
        %v2635 = vpop.permute.xlu0 %2634
        %v2637 = vmul.f32 %v2385, %v2460
        %v2638 = vmul.f32 %v2386, %v2465
        %v2639 = vmul.f32 %v2387, %v2470
        %v2640 = vmul.f32 %v2388, %v2475
        %v2641 = vmul.f32 %v2389, %v2480
        %v2642 = vmul.f32 %v2390, %v2485
        %v2643 = vmul.f32 %v2391, %v2490
        %v2644 = vmul.f32 %v2392, %v2495
        %v2645 = vmul.f32 %v2393, %v2500
        %v2646 = vmul.f32 %v2394, %v2505
        %v2647 = vmul.f32 %v2395, %v2510
        %v2648 = vmul.f32 %v2396, %v2515
        %v2649 = vmul.f32 %v2397, %v2520
        %v2650 = vmul.f32 %v2398, %v2525
        %v2651 = vmul.f32 %v2399, %v2530
        %v2652 = vmul.f32 %v2400, %v2535
        %v2653 = vmul.f32 %v2401, %v2540
        %v2654 = vmul.f32 %v2402, %v2545
        %v2655 = vmul.f32 %v2403, %v2550
        %v2656 = vmul.f32 %v2404, %v2555
        %v2657 = vmul.f32 %v2405, %v2560
        %v2658 = vmul.f32 %v2406, %v2565
        %v2659 = vmul.f32 %v2407, %v2570
        %v2660 = vmul.f32 %v2408, %v2575
        %v2661 = vmul.f32 %v2409, %v2580
        %v2662 = vmul.f32 %v2410, %v2585
        %v2663 = vmul.f32 %v2411, %v2590
        %v2664 = vmul.f32 %v2412, %v2595
        %v2665 = vmul.f32 %v2413, %v2600
        %v2666 = vmul.f32 %v2414, %v2605
        %v2667 = vmul.f32 %v2415, %v2610
        %v2668 = vmul.f32 %v2416, %v2615
        %v2669 = vmul.f32 %v2417, %v2620
        %v2670 = vmul.f32 %v2418, %v2625
        %v2671 = vmul.f32 %v2419, %v2630
        %v2672 = vmul.f32 %v2420, %v2635
        %vm2673 = vcmask 261120
        %v2674 = vsel %vm2673, %v2637, 0.0
        %v2675 = vsel %vm2673, %v2638, 0.0
        %v2676 = vadd.f32 %v2674, %v2675
        %v2677 = vsel %vm2673, %v2639, 0.0
        %v2678 = vadd.f32 %v2676, %v2677
        %v2679 = vsel %vm2673, %v2640, 0.0
        %v2680 = vadd.f32 %v2678, %v2679
        %v2681 = vsel %vm2673, %v2641, 0.0
        %v2682 = vadd.f32 %v2680, %v2681
        %v2683 = vsel %vm2673, %v2642, 0.0
        %v2684 = vadd.f32 %v2682, %v2683
        %v2685 = vsel %vm2673, %v2643, 0.0
        %v2686 = vadd.f32 %v2684, %v2685
        %v2687 = vsel %vm2673, %v2644, 0.0
        %v2688 = vadd.f32 %v2686, %v2687
        %v2689 = vsel %vm2673, %v2645, 0.0
        %v2690 = vadd.f32 %v2688, %v2689
        %v2691 = vsel %vm2673, %v2646, 0.0
        %v2692 = vadd.f32 %v2690, %v2691
        %v2693 = vsel %vm2673, %v2647, 0.0
        %v2694 = vadd.f32 %v2692, %v2693
        %v2695 = vsel %vm2673, %v2648, 0.0
        %v2696 = vadd.f32 %v2694, %v2695
        %v2697 = vsel %vm2673, %v2649, 0.0
        %v2698 = vadd.f32 %v2696, %v2697
        %v2699 = vsel %vm2673, %v2650, 0.0
        %v2700 = vadd.f32 %v2698, %v2699
        %v2701 = vsel %vm2673, %v2651, 0.0
        %v2702 = vadd.f32 %v2700, %v2701
        %v2703 = vsel %vm2673, %v2652, 0.0
        %v2704 = vadd.f32 %v2702, %v2703
        %v2705 = vsel %vm2673, %v2653, 0.0
        %v2706 = vadd.f32 %v2704, %v2705
        %v2707 = vsel %vm2673, %v2654, 0.0
        %v2708 = vadd.f32 %v2706, %v2707
        %v2709 = vsel %vm2673, %v2655, 0.0
        %v2710 = vadd.f32 %v2708, %v2709
        %v2711 = vsel %vm2673, %v2656, 0.0
        %v2712 = vadd.f32 %v2710, %v2711
        %v2713 = vsel %vm2673, %v2657, 0.0
        %v2714 = vadd.f32 %v2712, %v2713
        %v2715 = vsel %vm2673, %v2658, 0.0
        %v2716 = vadd.f32 %v2714, %v2715
        %v2717 = vsel %vm2673, %v2659, 0.0
        %v2718 = vadd.f32 %v2716, %v2717
        %v2719 = vsel %vm2673, %v2660, 0.0
        %v2720 = vadd.f32 %v2718, %v2719
        %v2721 = vsel %vm2673, %v2661, 0.0
        %v2722 = vadd.f32 %v2720, %v2721
        %v2723 = vsel %vm2673, %v2662, 0.0
        %v2724 = vadd.f32 %v2722, %v2723
        %v2725 = vsel %vm2673, %v2663, 0.0
        %v2726 = vadd.f32 %v2724, %v2725
        %v2727 = vsel %vm2673, %v2664, 0.0
        %v2728 = vadd.f32 %v2726, %v2727
        %v2729 = vsel %vm2673, %v2665, 0.0
        %v2730 = vadd.f32 %v2728, %v2729
        %v2731 = vsel %vm2673, %v2666, 0.0
        %v2732 = vadd.f32 %v2730, %v2731
        %v2733 = vsel %vm2673, %v2667, 0.0
        %v2734 = vadd.f32 %v2732, %v2733
        %v2735 = vsel %vm2673, %v2668, 0.0
        %v2736 = vadd.f32 %v2734, %v2735
        %v2737 = vsel %vm2673, %v2669, 0.0
        %v2738 = vadd.f32 %v2736, %v2737
        %v2739 = vsel %vm2673, %v2670, 0.0
        %v2740 = vadd.f32 %v2738, %v2739
        %v2741 = vsel %vm2673, %v2671, 0.0
        %v2742 = vadd.f32 %v2740, %v2741
        %v2743 = vsel %vm2673, %v2672, 0.0
        %v2744 = vadd.f32 %v2742, %v2743
        %v2745 = vrot.slane %v2744, 4
        %v2746 = vadd.f32 %v2744, %v2745
        %v2747 = vrot.slane %v2746, 2
        %v2748 = vadd.f32 %v2746, %v2747
        %v2749 = vrot.slane %v2748, 1
        %v2750 = vadd.f32 %v2748, %v2749
        %s2751 = scalar_lea.vmem [#allocation2], %s16
        %vm2752 = vcmask 253952
        %2753 = vst.msk [vmem:[%s2751] sm:$0x1] %vm2752, %v2750
        // Predicated region
        $region41: #{tpu_custom_call.1} parent=35 // pred_check
          %p2754 = pneg %p118
        $region42: #{tpu_custom_call.1} parent=35 // pred_check_branch
          %2756 = sbr.rel (%p2754) target = $region44
        $region43: #{tpu_custom_call.1} parent=35 // pred_region
          %2758 = vsyncadd [#allocation3], 0
          %s2759 = sshll.u32 [#allocation2], 4
          %s2760 = int_to_ptr.vmem [resolvable:$true] %s2759
          %s2761 = sshll.u32 %s4, 4
          %s2762 = int_to_ptr.hbm [resolvable:$true] %s2761
          %2767 = dma.vmem_to_hbm [thread:$0]  %s2760, 256, %s2762, [#allocation3], 128, 128, 8
        $region44: #{tpu_custom_call.1} parent=35 // pred_fallthru
          _
        // Predicated region
        $region45: #{tpu_custom_call.1} parent=35 // pred_check
          %p2768 = pneg %p118
        $region46: #{tpu_custom_call.1} parent=35 // pred_check_branch
          %2770 = sbr.rel (%p2768) target = $region48
        $region47: #{tpu_custom_call.1} parent=35 // pred_region
          %2772 = dma.done [#allocation3], 256
        $region48: #{tpu_custom_call.1} parent=35 // pred_fallthru
          _
      $region36: #{tpu_custom_call.1} parent=5 // pred_fallthru
        _
      %p2773 = scmp.le.s32.totalorder 2, %s11
      // Predicated region
      $region49: #{tpu_custom_call.1} parent=5 // pred_check
        %p2774 = pneg %p2773
      $region50: #{tpu_custom_call.1} parent=5 // pred_check_branch
        %2776 = sbr.rel (%p2774) target = $region52
      $region51: #{tpu_custom_call.1} parent=5 // pred_region
        %s2777 = ssub.s32 %s11, 2
      $region52: #{tpu_custom_call.1} parent=5 // pred_fallthru
        _
    $region6: #{tpu_custom_call.1} parent=1 // loop_footer
      %s15 = sadd.s32 1, %s11
    $region7: #{tpu_custom_call.1} parent=1 // loop_footer_branch
      %10 = sbr.rel target = $region3
    $region8: #{tpu_custom_call.1} parent=1 // loop_exit
      _
    %2778 = vsyncpa [#allocation3], 1
    %s2779 = scalar_lea.sflag [#allocation3], 1
    %2780 = vsyncpa %s2779, 1

</llo_original>
